<compile_context>
chip_gen: v7x
topology: tpu7x:2x2x1
jax: 0.10.0
libtpu: 0.0.40
codegen_flags: <defaults>
</compile_context>

<pallas_src>
import functools
import math

import jax
import jax.numpy as jnp
from jax.experimental import pallas as pl
from jax.experimental.pallas import tpu as pltpu

# Conservative explicit VMEM budget (safe on v5e/v6e/v7x; re-derive per chip —
# v7x only has 64 MiB physical VMEM per TensorCore).
VMEM_LIMIT = 32 * 1024 * 1024


# ----------------------------------------------------------------------------
# Kernel 1: row-tiled fused matmul + bias (LoRA already folded into W_eff).
#   x block    : (TM, D)   streamed over the grid (parallel)
#   W, b blocks: resident in VMEM across all row tiles
# ----------------------------------------------------------------------------
def matmul_bias_kernel(x_ref, w_ref, b_ref, o_ref):
    x = x_ref[...].astype(jnp.bfloat16)       # bf16 MXU operands
    w = w_ref[...]                            # already bf16 (cast once in wrapper)
    acc = jnp.dot(x, w, preferred_element_type=jnp.float32)   # f32 accumulation
    o_ref[...] = (acc + b_ref[...]).astype(o_ref.dtype)


def fused_linear(x2d, w_bf16, b_row, out_dtype, *, tm=512):
    """out = x2d @ w + b, tiled over rows; w/b stay resident in VMEM."""
    M, D = x2d.shape
    N = w_bf16.shape[1]
    TM = min(tm, M)                           # toy case: TM == M; real case: 512
    return pl.pallas_call(
        matmul_bias_kernel,
        out_shape=jax.ShapeDtypeStruct((M, N), out_dtype),
        grid=(pl.cdiv(M, TM),),
        in_specs=[
            pl.BlockSpec((TM, D), lambda i: (i, 0)),   # activations: row-tiled
            pl.BlockSpec((D, N), lambda i: (0, 0)),    # weights: resident
            pl.BlockSpec((1, N), lambda i: (0, 0)),    # bias: resident
        ],
        out_specs=pl.BlockSpec((TM, N), lambda i: (i, 0)),
        compiler_params=pltpu.CompilerParams(
            dimension_semantics=("parallel",),
            vmem_limit_bytes=VMEM_LIMIT),
    )(x2d, w_bf16, b_row)


# ----------------------------------------------------------------------------
# Kernel 2: multi-head attention.  One grid step = one (batch, q-row-tile);
# ALL heads are handled inside the step.  q/k/v are column slabs of the fused
# (B, S, 3*D) qkv tensor selected purely by BlockSpec index maps (no HBM
# transpose / split).  mask is an additive key-padding mask (B, 1, S).
# ----------------------------------------------------------------------------
def attention_kernel(q_ref, k_ref, v_ref, m_ref, o_ref, *, num_heads, sm_scale):
    D = q_ref.shape[-1]
    dh = D // num_heads
    # Fold the 1/sqrt(dh) scale into q once (cheaper than scaling (TQ,S) scores).
    q = (q_ref[0].astype(jnp.float32) * sm_scale).astype(jnp.bfloat16)   # (TQ, D)
    k = k_ref[0].astype(jnp.bfloat16)                                    # (S,  D)
    v = v_ref[0].astype(jnp.bfloat16)                                    # (S,  D)
    mask = m_ref[0].astype(jnp.float32)                                  # (1,  S)

    dims = (((1,), (1,)), ((), ()))   # contract head_dim; no explicit k transpose
    outs = []
    for h in range(num_heads):        # static unroll: all heads per grid step
        sl = slice(h * dh, (h + 1) * dh)
        s = jax.lax.dot_general(q[:, sl], k[:, sl], dims,
                                preferred_element_type=jnp.float32)      # (TQ, S)
        s = s + mask                                                     # additive mask
        s = s - jnp.max(s, axis=-1, keepdims=True)
        p = jnp.exp(s)
        p = p * pl.reciprocal(jnp.sum(p, axis=-1, keepdims=True), approx=True)
        outs.append(jnp.dot(p.astype(jnp.bfloat16), v[:, sl],
                            preferred_element_type=jnp.float32))         # (TQ, dh)
    # Single lane-dense (TQ, D) store.
    o_ref[0] = jnp.concatenate(outs, axis=-1).astype(o_ref.dtype)


def attention(qkv, attn_mask, *, num_heads, tq=256):
    """qkv: (B, S, 3*D) fused projection; attn_mask: (B, 1, S) additive mask."""
    B, S, three_d = qkv.shape
    D = three_d // 3
    TQ = min(tq, S)
    kern = functools.partial(attention_kernel, num_heads=num_heads,
                             sm_scale=1.0 / math.sqrt(D // num_heads))
    return pl.pallas_call(
        kern,
        out_shape=jax.ShapeDtypeStruct((B, S, D), jnp.bfloat16),
        grid=(B, pl.cdiv(S, TQ)),
        in_specs=[
            pl.BlockSpec((1, TQ, D), lambda b, qi: (b, qi, 0)),  # q slab (cols [0, D))
            pl.BlockSpec((1, S, D), lambda b, qi: (b, 0, 1)),    # k slab (cols [D, 2D))
            pl.BlockSpec((1, S, D), lambda b, qi: (b, 0, 2)),    # v slab (cols [2D, 3D))
            pl.BlockSpec((1, 1, S), lambda b, qi: (b, 0, 0)),    # key-padding mask
        ],
        out_specs=pl.BlockSpec((1, TQ, D), lambda b, qi: (b, qi, 0)),
        compiler_params=pltpu.CompilerParams(
            dimension_semantics=("parallel", "parallel"),
            vmem_limit_bytes=VMEM_LIMIT),
    )(qkv, qkv, qkv, attn_mask)   # same qkv array read through three BlockSpecs


# ----------------------------------------------------------------------------
# LoraMha forward (weight folding + reshapes in JAX, hot path in the kernels)
# ----------------------------------------------------------------------------
@functools.partial(jax.jit, static_argnames=("num_heads", "r", "alpha"))
def lora_mha_forward(params, x, attn_mask, *, num_heads, r, alpha):
    B, S, D = x.shape
    scale = alpha / r

    # Fold LoRA into effective weights once (rank-r matmul, negligible), cast
    # to bf16 for the MXU.  Identical math to base + scale*(x@A)@B.
    w_qkv_eff = (params["w_qkv"]
                 + scale * params["A_qkv_cat"] @ params["B_qkv_block"]
                 ).astype(jnp.bfloat16)
    w_fc_eff = (params["w_fc"]
                + scale * params["A_fc"] @ params["B_fc"]).astype(jnp.bfloat16)

    x2d = x.reshape(B * S, D)
    qkv = fused_linear(x2d, w_qkv_eff, params["b_qkv"].reshape(1, -1),
                       out_dtype=jnp.bfloat16)                  # (B*S, 3D) bf16
    qkv = qkv.reshape(B, S, 3 * D)

    attn = attention(qkv, attn_mask, num_heads=num_heads)       # (B, S, D) bf16

    out = fused_linear(attn.reshape(B * S, D), w_fc_eff,
                       params["b_fc"].reshape(1, -1), out_dtype=jnp.float32)
    return out.reshape(B, S, D)


# ----------------------------------------------------------------------------
# Pure-JAX reference (un-folded LoRA, f32) for correctness checking
# ----------------------------------------------------------------------------
def lora_mha_reference(params, x, attn_mask, *, num_heads, r, alpha):
    B, S, D = x.shape
    dh = D // num_heads
    scale = alpha / r
    x2d = x.reshape(B * S, D)
    qkv = (x2d @ params["w_qkv"] + params["b_qkv"]
           + scale * (x2d @ params["A_qkv_cat"]) @ params["B_qkv_block"])
    qkv = qkv.reshape(B, S, 3 * D)
    q, k, v = jnp.split(qkv, 3, axis=-1)
    q = q.reshape(B, S, num_heads, dh).transpose(0, 2, 1, 3)
    k = k.reshape(B, S, num_heads, dh).transpose(0, 2, 1, 3)
    v = v.reshape(B, S, num_heads, dh).transpose(0, 2, 1, 3)
    s = jnp.einsum("bhqd,bhkd->bhqk", q, k) / math.sqrt(dh) + attn_mask[:, :, None, :]
    p = jax.nn.softmax(s, axis=-1)
    o = jnp.einsum("bhqk,bhkd->bhqd", p, v).transpose(0, 2, 1, 3).reshape(B * S, D)
    out = (o @ params["w_fc"] + params["b_fc"]
           + scale * (o @ params["A_fc"]) @ params["B_fc"])
    return out.reshape(B, S, D)


# ----------------------------------------------------------------------------
# Deterministic parameter construction (shapes follow LoraMha.__init__)
# ----------------------------------------------------------------------------
def make_params(key, D, r, enable_lora):
    ks = jax.random.split(key, 8)
    n_seg = len(enable_lora)
    seg_dim = 3 * D // n_seg
    n_en = sum(enable_lora)

    p = {}
    p["w_qkv"] = 0.02 * jax.random.normal(ks[0], (D, 3 * D), jnp.float32)
    p["b_qkv"] = 0.02 * jax.random.normal(ks[1], (3 * D,), jnp.float32)
    p["w_fc"] = 0.02 * jax.random.normal(ks[2], (D, D), jnp.float32)
    p["b_fc"] = 0.02 * jax.random.normal(ks[3], (D,), jnp.float32)

    # Segmented LoRA for the qkv projection: lora_A_list[i]: (D, r),
    # lora_B_list[i]: (r, seg_dim).  Folded exactly into:
    #   A_qkv_cat   = concat_i A_i                          -> (D, n_en * r)
    #   B_qkv_block = block matrix with B_i in rows [i*r:(i+1)*r],
    #                 cols [k*seg_dim:(k+1)*seg_dim]        -> (n_en * r, 3D)
    a_list = [jax.random.uniform(jax.random.fold_in(ks[4], i), (D, r), jnp.float32)
              for i in range(n_en)]
    b_list = [0.02 * jax.random.normal(jax.random.fold_in(ks[5], i),
                                       (r, seg_dim), jnp.float32)
              for i in range(n_en)]   # (PyTorch inits these to zero; see NOTE above)
    A_cat = jnp.concatenate(a_list, axis=1)
    B_block = jnp.zeros((n_en * r, 3 * D), jnp.float32)
    i = 0
    for k in range(n_seg):
        if enable_lora[k]:
            B_block = B_block.at[i * r:(i + 1) * r,
                                 k * seg_dim:(k + 1) * seg_dim].set(b_list[i])
            i += 1
    p["A_qkv_cat"] = A_cat
    p["B_qkv_block"] = B_block

    # Plain LoRA for fc: lora_A (D, r), lora_B (r, D)
    p["A_fc"] = jax.random.uniform(ks[6], (D, r), jnp.float32)
    p["B_fc"] = 0.02 * jax.random.normal(ks[7], (r, D), jnp.float32)
    return p


if __name__ == "__main__":
    # Small but lane-aligned shapes: hidden = 128 so all block last-dims are
    # multiples of 128 (lane-dense stores) even at toy size.
    B, S, D = 2, 16, 128
    num_heads, r, alpha = 4, 4, 8
    enable_lora = [True, False, True]   # LoRA on Q and V segments of the qkv proj

    key = jax.random.PRNGKey(0)
    kx, kp = jax.random.split(key)
    x = jax.random.normal(kx, (B, S, D), jnp.float32)

    # Additive key-padding mask (B, 1, S): batch 0 sees all 16 keys, batch 1
    # only the first 10 (BERT-style extended attention mask).
    valid = jnp.array([S, 10])
    col = jnp.arange(S)[None, None, :]                     # (1, 1, S)
    attn_mask = jnp.where(col < valid[:, None, None], 0.0, -1e9).astype(jnp.float32)

    params = make_params(kp, D, r, enable_lora)

    out = lora_mha_forward(params, x, attn_mask,
                           num_heads=num_heads, r=r, alpha=alpha)
    out = jax.block_until_ready(out)

    ref = lora_mha_reference(params, x, attn_mask,
                             num_heads=num_heads, r=r, alpha=alpha)
    assert out.shape == (B, S, D)
    # bf16 MXU operands (per perf feedback) -> relaxed tolerance vs f32 reference.
    assert jnp.allclose(out, ref, atol=5e-2, rtol=5e-2), (
        f"mismatch vs JAX reference: max abs err = {jnp.max(jnp.abs(out - ref)):.4e}")

    print("KERNEL_OK")
</pallas_src>

<mosaic_0001>
module attributes {stable_mosaic.version = 11 : i64} {
  func.func @matmul_bias_kernel(%arg0: i32, %arg1: memref<32x128xf32, #tpu.memory_space<vmem>>, %arg2: memref<128x384xbf16, #tpu.memory_space<vmem>>, %arg3: memref<1x384xf32, #tpu.memory_space<vmem>>, %arg4: memref<32x384xbf16, #tpu.memory_space<vmem>>) attributes {dimension_semantics = [#tpu.dimension_semantics<parallel>], iteration_bounds = array<i64: 1>, scalar_prefetch = 0 : i64, scratch_operands = 0 : i64, tpu.core_type = #tpu.core_type<tc>, window_params = [{transform_indices = @transform_0, window_bounds = array<i64: 32, 128>}, {pipeline_mode = #tpu.pipeline_mode<synchronous>, transform_indices = @transform_1, window_bounds = array<i64: 128, 384>}, {pipeline_mode = #tpu.pipeline_mode<synchronous>, transform_indices = @transform_2, window_bounds = array<i64: 1, 384>}, {transform_indices = @transform_3, window_bounds = array<i64: 32, 384>}]} {
    %c0 = arith.constant 0 : index
    %c0_0 = arith.constant 0 : index
    %0 = vector.load %arg1[%c0, %c0_0] : memref<32x128xf32, #tpu.memory_space<vmem>>, vector<32x128xf32>
    %1 = arith.truncf %0 : vector<32x128xf32> to vector<32x128xbf16>
    %c0_1 = arith.constant 0 : index
    %c0_2 = arith.constant 0 : index
    %2 = vector.load %arg2[%c0_1, %c0_2] : memref<128x384xbf16, #tpu.memory_space<vmem>>, vector<128x384xbf16>
    %cst = arith.constant dense<0.000000e+00> : vector<32x384xf32>
    %3 = tpu.matmul %1, %2, %cst {dimension_numbers = #tpu.dot_dimension_numbers<[1], [0], [0], [1], [0, 0, 1, 1], [], []>} : vector<32x128xbf16>, vector<128x384xbf16>, vector<32x384xf32> -> vector<32x384xf32>
    %c0_3 = arith.constant 0 : index
    %c0_4 = arith.constant 0 : index
    %4 = vector.load %arg3[%c0_3, %c0_4] : memref<1x384xf32, #tpu.memory_space<vmem>>, vector<1x384xf32>
    %5 = vector.broadcast %4 : vector<1x384xf32> to vector<32x384xf32>
    %6 = arith.addf %3, %5 : vector<32x384xf32>
    %7 = arith.truncf %6 : vector<32x384xf32> to vector<32x384xbf16>
    %c0_5 = arith.constant 0 : index
    %c0_6 = arith.constant 0 : index
    %8 = vector.load %arg4[%c0_5, %c0_6] : memref<32x384xbf16, #tpu.memory_space<vmem>>, vector<32x384xbf16>
    tpu.vector_store %arg4[%c0_5, %c0_6], %7 {strides = array<i32>} : memref<32x384xbf16, #tpu.memory_space<vmem>>, vector<32x384xbf16>,
    return
  }
  func.func @transform_0(%arg0: i32) -> (i32, i32) {
    %c0_i32 = arith.constant 0 : i32
    %c0_i32_0 = arith.constant 0 : i32
    return %arg0, %c0_i32 : i32, i32
  }
  func.func @transform_1(%arg0: i32) -> (i32, i32) {
    %c0_i32 = arith.constant 0 : i32
    %c0_i32_0 = arith.constant 0 : i32
    %c0_i32_1 = arith.constant 0 : i32
    return %c0_i32, %c0_i32_0 : i32, i32
  }
  func.func @transform_2(%arg0: i32) -> (i32, i32) {
    %c0_i32 = arith.constant 0 : i32
    %c0_i32_0 = arith.constant 0 : i32
    %c0_i32_1 = arith.constant 0 : i32
    return %c0_i32, %c0_i32_0 : i32, i32
  }
  func.func @transform_3(%arg0: i32) -> (i32, i32) {
    %c0_i32 = arith.constant 0 : i32
    %c0_i32_0 = arith.constant 0 : i32
    return %arg0, %c0_i32 : i32, i32
  }
}

module attributes {stable_mosaic.version = 11 : i64} {
  func.func @attention_kernel(%arg0: i32, %arg1: i32, %arg2: memref<1x16x128xbf16, #tpu.memory_space<vmem>>, %arg3: memref<1x16x128xbf16, #tpu.memory_space<vmem>>, %arg4: memref<1x16x128xbf16, #tpu.memory_space<vmem>>, %arg5: memref<1x1x16xf32, #tpu.memory_space<vmem>>, %arg6: memref<1x16x128xbf16, #tpu.memory_space<vmem>>) attributes {dimension_semantics = [#tpu.dimension_semantics<parallel>, #tpu.dimension_semantics<parallel>], iteration_bounds = array<i64: 2, 1>, scalar_prefetch = 0 : i64, scratch_operands = 0 : i64, tpu.core_type = #tpu.core_type<tc>, window_params = [{transform_indices = @transform_0, window_bounds = array<i64: 1, 16, 128>}, {transform_indices = @transform_1, window_bounds = array<i64: 1, 16, 128>}, {transform_indices = @transform_2, window_bounds = array<i64: 1, 16, 128>}, {transform_indices = @transform_3, window_bounds = array<i64: 1, 1, 16>}, {transform_indices = @transform_4, window_bounds = array<i64: 1, 16, 128>}]} {
    %c0 = arith.constant 0 : index
    %c0_0 = arith.constant 0 : index
    %c0_1 = arith.constant 0 : index
    %0 = vector.load %arg2[%c0, %c0_0, %c0_1] : memref<1x16x128xbf16, #tpu.memory_space<vmem>>, vector<1x16x128xbf16>
    %1 = vector.shape_cast %0 : vector<1x16x128xbf16> to vector<16x128xbf16>
    %2 = arith.extf %1 : vector<16x128xbf16> to vector<16x128xf32>
    %cst = arith.constant 0.176776692 : f32
    %3 = vector.broadcast %cst : f32 to vector<16x128xf32>
    %4 = arith.mulf %2, %3 : vector<16x128xf32>
    %5 = arith.truncf %4 : vector<16x128xf32> to vector<16x128xbf16>
    %c0_2 = arith.constant 0 : index
    %c0_3 = arith.constant 0 : index
    %c0_4 = arith.constant 0 : index
    %6 = vector.load %arg3[%c0_2, %c0_3, %c0_4] : memref<1x16x128xbf16, #tpu.memory_space<vmem>>, vector<1x16x128xbf16>
    %7 = vector.shape_cast %6 : vector<1x16x128xbf16> to vector<16x128xbf16>
    %c0_5 = arith.constant 0 : index
    %c0_6 = arith.constant 0 : index
    %c0_7 = arith.constant 0 : index
    %8 = vector.load %arg4[%c0_5, %c0_6, %c0_7] : memref<1x16x128xbf16, #tpu.memory_space<vmem>>, vector<1x16x128xbf16>
    %9 = vector.shape_cast %8 : vector<1x16x128xbf16> to vector<16x128xbf16>
    %c0_8 = arith.constant 0 : index
    %c0_9 = arith.constant 0 : index
    %c0_10 = arith.constant 0 : index
    %10 = vector.load %arg5[%c0_8, %c0_9, %c0_10] : memref<1x1x16xf32, #tpu.memory_space<vmem>>, vector<1x1x16xf32>
    %11 = vector.shape_cast %10 : vector<1x1x16xf32> to vector<1x16xf32>
    %12 = vector.extract_strided_slice %5 {offsets = [0, 0], sizes = [16, 32], strides = [1, 1]} : vector<16x128xbf16> to vector<16x32xbf16>
    %13 = vector.extract_strided_slice %7 {offsets = [0, 0], sizes = [16, 32], strides = [1, 1]} : vector<16x128xbf16> to vector<16x32xbf16>
    %cst_11 = arith.constant dense<0.000000e+00> : vector<16x16xf32>
    %14 = tpu.matmul %12, %13, %cst_11 {dimension_numbers = #tpu.dot_dimension_numbers<[1], [1], [0], [0], [0, 0, 1, 0], [], []>} : vector<16x32xbf16>, vector<16x32xbf16>, vector<16x16xf32> -> vector<16x16xf32>
    %15 = vector.broadcast %11 : vector<1x16xf32> to vector<16x16xf32>
    %16 = arith.addf %14, %15 : vector<16x16xf32>
    %cst_12 = arith.constant dense<0xFF800000> : vector<16xf32>
    %17 = vector.multi_reduction <maximumf>, %16, %cst_12 [1] : vector<16x16xf32> to vector<16xf32>
    %18 = vector.shape_cast %17 : vector<16xf32> to vector<16x1xf32>
    %19 = vector.broadcast %18 : vector<16x1xf32> to vector<16x16xf32>
    %20 = arith.subf %16, %19 : vector<16x16xf32>
    %21 = math.exp %20 : vector<16x16xf32>
    %cst_13 = arith.constant dense<0.000000e+00> : vector<16xf32>
    %22 = vector.multi_reduction <add>, %21, %cst_13 [1] : vector<16x16xf32> to vector<16xf32>
    %23 = vector.shape_cast %22 : vector<16xf32> to vector<16x1xf32>
    %24 = tpu.reciprocal %23 {approx = true} : vector<16x1xf32> -> vector<16x1xf32>
    %25 = vector.broadcast %24 : vector<16x1xf32> to vector<16x16xf32>
    %26 = arith.mulf %21, %25 : vector<16x16xf32>
    %27 = arith.truncf %26 : vector<16x16xf32> to vector<16x16xbf16>
    %28 = vector.extract_strided_slice %9 {offsets = [0, 0], sizes = [16, 32], strides = [1, 1]} : vector<16x128xbf16> to vector<16x32xbf16>
    %cst_14 = arith.constant dense<0.000000e+00> : vector<16x32xf32>
    %29 = tpu.matmul %27, %28, %cst_14 {dimension_numbers = #tpu.dot_dimension_numbers<[1], [0], [0], [1], [0, 0, 1, 1], [], []>} : vector<16x16xbf16>, vector<16x32xbf16>, vector<16x32xf32> -> vector<16x32xf32>
    %30 = vector.extract_strided_slice %5 {offsets = [0, 32], sizes = [16, 32], strides = [1, 1]} : vector<16x128xbf16> to vector<16x32xbf16>
    %31 = vector.extract_strided_slice %7 {offsets = [0, 32], sizes = [16, 32], strides = [1, 1]} : vector<16x128xbf16> to vector<16x32xbf16>
    %cst_15 = arith.constant dense<0.000000e+00> : vector<16x16xf32>
    %32 = tpu.matmul %30, %31, %cst_15 {dimension_numbers = #tpu.dot_dimension_numbers<[1], [1], [0], [0], [0, 0, 1, 0], [], []>} : vector<16x32xbf16>, vector<16x32xbf16>, vector<16x16xf32> -> vector<16x16xf32>
    %33 = vector.broadcast %11 : vector<1x16xf32> to vector<16x16xf32>
    %34 = arith.addf %32, %33 : vector<16x16xf32>
    %cst_16 = arith.constant dense<0xFF800000> : vector<16xf32>
    %35 = vector.multi_reduction <maximumf>, %34, %cst_16 [1] : vector<16x16xf32> to vector<16xf32>
    %36 = vector.shape_cast %35 : vector<16xf32> to vector<16x1xf32>
    %37 = vector.broadcast %36 : vector<16x1xf32> to vector<16x16xf32>
    %38 = arith.subf %34, %37 : vector<16x16xf32>
    %39 = math.exp %38 : vector<16x16xf32>
    %cst_17 = arith.constant dense<0.000000e+00> : vector<16xf32>
    %40 = vector.multi_reduction <add>, %39, %cst_17 [1] : vector<16x16xf32> to vector<16xf32>
    %41 = vector.shape_cast %40 : vector<16xf32> to vector<16x1xf32>
    %42 = tpu.reciprocal %41 {approx = true} : vector<16x1xf32> -> vector<16x1xf32>
    %43 = vector.broadcast %42 : vector<16x1xf32> to vector<16x16xf32>
    %44 = arith.mulf %39, %43 : vector<16x16xf32>
    %45 = arith.truncf %44 : vector<16x16xf32> to vector<16x16xbf16>
    %46 = vector.extract_strided_slice %9 {offsets = [0, 32], sizes = [16, 32], strides = [1, 1]} : vector<16x128xbf16> to vector<16x32xbf16>
    %cst_18 = arith.constant dense<0.000000e+00> : vector<16x32xf32>
    %47 = tpu.matmul %45, %46, %cst_18 {dimension_numbers = #tpu.dot_dimension_numbers<[1], [0], [0], [1], [0, 0, 1, 1], [], []>} : vector<16x16xbf16>, vector<16x32xbf16>, vector<16x32xf32> -> vector<16x32xf32>
    %48 = vector.extract_strided_slice %5 {offsets = [0, 64], sizes = [16, 32], strides = [1, 1]} : vector<16x128xbf16> to vector<16x32xbf16>
    %49 = vector.extract_strided_slice %7 {offsets = [0, 64], sizes = [16, 32], strides = [1, 1]} : vector<16x128xbf16> to vector<16x32xbf16>
    %cst_19 = arith.constant dense<0.000000e+00> : vector<16x16xf32>
    %50 = tpu.matmul %48, %49, %cst_19 {dimension_numbers = #tpu.dot_dimension_numbers<[1], [1], [0], [0], [0, 0, 1, 0], [], []>} : vector<16x32xbf16>, vector<16x32xbf16>, vector<16x16xf32> -> vector<16x16xf32>
    %51 = vector.broadcast %11 : vector<1x16xf32> to vector<16x16xf32>
    %52 = arith.addf %50, %51 : vector<16x16xf32>
    %cst_20 = arith.constant dense<0xFF800000> : vector<16xf32>
    %53 = vector.multi_reduction <maximumf>, %52, %cst_20 [1] : vector<16x16xf32> to vector<16xf32>
    %54 = vector.shape_cast %53 : vector<16xf32> to vector<16x1xf32>
    %55 = vector.broadcast %54 : vector<16x1xf32> to vector<16x16xf32>
    %56 = arith.subf %52, %55 : vector<16x16xf32>
    %57 = math.exp %56 : vector<16x16xf32>
    %cst_21 = arith.constant dense<0.000000e+00> : vector<16xf32>
    %58 = vector.multi_reduction <add>, %57, %cst_21 [1] : vector<16x16xf32> to vector<16xf32>
    %59 = vector.shape_cast %58 : vector<16xf32> to vector<16x1xf32>
    %60 = tpu.reciprocal %59 {approx = true} : vector<16x1xf32> -> vector<16x1xf32>
    %61 = vector.broadcast %60 : vector<16x1xf32> to vector<16x16xf32>
    %62 = arith.mulf %57, %61 : vector<16x16xf32>
    %63 = arith.truncf %62 : vector<16x16xf32> to vector<16x16xbf16>
    %64 = vector.extract_strided_slice %9 {offsets = [0, 64], sizes = [16, 32], strides = [1, 1]} : vector<16x128xbf16> to vector<16x32xbf16>
    %cst_22 = arith.constant dense<0.000000e+00> : vector<16x32xf32>
    %65 = tpu.matmul %63, %64, %cst_22 {dimension_numbers = #tpu.dot_dimension_numbers<[1], [0], [0], [1], [0, 0, 1, 1], [], []>} : vector<16x16xbf16>, vector<16x32xbf16>, vector<16x32xf32> -> vector<16x32xf32>
    %66 = vector.extract_strided_slice %5 {offsets = [0, 96], sizes = [16, 32], strides = [1, 1]} : vector<16x128xbf16> to vector<16x32xbf16>
    %67 = vector.extract_strided_slice %7 {offsets = [0, 96], sizes = [16, 32], strides = [1, 1]} : vector<16x128xbf16> to vector<16x32xbf16>
    %cst_23 = arith.constant dense<0.000000e+00> : vector<16x16xf32>
    %68 = tpu.matmul %66, %67, %cst_23 {dimension_numbers = #tpu.dot_dimension_numbers<[1], [1], [0], [0], [0, 0, 1, 0], [], []>} : vector<16x32xbf16>, vector<16x32xbf16>, vector<16x16xf32> -> vector<16x16xf32>
    %69 = vector.broadcast %11 : vector<1x16xf32> to vector<16x16xf32>
    %70 = arith.addf %68, %69 : vector<16x16xf32>
    %cst_24 = arith.constant dense<0xFF800000> : vector<16xf32>
    %71 = vector.multi_reduction <maximumf>, %70, %cst_24 [1] : vector<16x16xf32> to vector<16xf32>
    %72 = vector.shape_cast %71 : vector<16xf32> to vector<16x1xf32>
    %73 = vector.broadcast %72 : vector<16x1xf32> to vector<16x16xf32>
    %74 = arith.subf %70, %73 : vector<16x16xf32>
    %75 = math.exp %74 : vector<16x16xf32>
    %cst_25 = arith.constant dense<0.000000e+00> : vector<16xf32>
    %76 = vector.multi_reduction <add>, %75, %cst_25 [1] : vector<16x16xf32> to vector<16xf32>
    %77 = vector.shape_cast %76 : vector<16xf32> to vector<16x1xf32>
    %78 = tpu.reciprocal %77 {approx = true} : vector<16x1xf32> -> vector<16x1xf32>
    %79 = vector.broadcast %78 : vector<16x1xf32> to vector<16x16xf32>
    %80 = arith.mulf %75, %79 : vector<16x16xf32>
    %81 = arith.truncf %80 : vector<16x16xf32> to vector<16x16xbf16>
    %82 = vector.extract_strided_slice %9 {offsets = [0, 96], sizes = [16, 32], strides = [1, 1]} : vector<16x128xbf16> to vector<16x32xbf16>
    %cst_26 = arith.constant dense<0.000000e+00> : vector<16x32xf32>
    %83 = tpu.matmul %81, %82, %cst_26 {dimension_numbers = #tpu.dot_dimension_numbers<[1], [0], [0], [1], [0, 0, 1, 1], [], []>} : vector<16x16xbf16>, vector<16x32xbf16>, vector<16x32xf32> -> vector<16x32xf32>
    %84 = tpu.concatenate %29, %47, %65, %83 in 1 : vector<16x32xf32>, vector<16x32xf32>, vector<16x32xf32>, vector<16x32xf32> -> vector<16x128xf32>
    %85 = arith.truncf %84 : vector<16x128xf32> to vector<16x128xbf16>
    %c0_27 = arith.constant 0 : index
    %c0_28 = arith.constant 0 : index
    %c0_29 = arith.constant 0 : index
    %86 = vector.load %arg6[%c0_27, %c0_28, %c0_29] : memref<1x16x128xbf16, #tpu.memory_space<vmem>>, vector<1x16x128xbf16>
    %87 = vector.shape_cast %86 : vector<1x16x128xbf16> to vector<16x128xbf16>
    %88 = vector.shape_cast %85 : vector<16x128xbf16> to vector<1x16x128xbf16>
    tpu.vector_store %arg6[%c0_27, %c0_28, %c0_29], %88 {strides = array<i32>} : memref<1x16x128xbf16, #tpu.memory_space<vmem>>, vector<1x16x128xbf16>,
    return
  }
  func.func @transform_0(%arg0: i32, %arg1: i32) -> (i32, i32, i32) {
    %c0_i32 = arith.constant 0 : i32
    %c0_i32_0 = arith.constant 0 : i32
    return %arg0, %arg1, %c0_i32 : i32, i32, i32
  }
  func.func @transform_1(%arg0: i32, %arg1: i32) -> (i32, i32, i32) {
    %c0_i32 = arith.constant 0 : i32
    %c1_i32 = arith.constant 1 : i32
    %c0_i32_0 = arith.constant 0 : i32
    return %arg0, %c0_i32, %c1_i32 : i32, i32, i32
  }
  func.func @transform_2(%arg0: i32, %arg1: i32) -> (i32, i32, i32) {
    %c0_i32 = arith.constant 0 : i32
    %c2_i32 = arith.constant 2 : i32
    %c0_i32_0 = arith.constant 0 : i32
    return %arg0, %c0_i32, %c2_i32 : i32, i32, i32
  }
  func.func @transform_3(%arg0: i32, %arg1: i32) -> (i32, i32, i32) {
    %c0_i32 = arith.constant 0 : i32
    %c0_i32_0 = arith.constant 0 : i32
    %c0_i32_1 = arith.constant 0 : i32
    return %arg0, %c0_i32, %c0_i32_0 : i32, i32, i32
  }
  func.func @transform_4(%arg0: i32, %arg1: i32) -> (i32, i32, i32) {
    %c0_i32 = arith.constant 0 : i32
    %c0_i32_0 = arith.constant 0 : i32
    return %arg0, %arg1, %c0_i32 : i32, i32, i32
  }
}

module attributes {stable_mosaic.version = 11 : i64} {
  func.func @matmul_bias_kernel(%arg0: i32, %arg1: memref<32x128xbf16, #tpu.memory_space<vmem>>, %arg2: memref<128x128xbf16, #tpu.memory_space<vmem>>, %arg3: memref<1x128xf32, #tpu.memory_space<vmem>>, %arg4: memref<32x128xf32, #tpu.memory_space<vmem>>) attributes {dimension_semantics = [#tpu.dimension_semantics<parallel>], iteration_bounds = array<i64: 1>, scalar_prefetch = 0 : i64, scratch_operands = 0 : i64, tpu.core_type = #tpu.core_type<tc>, window_params = [{transform_indices = @transform_0, window_bounds = array<i64: 32, 128>}, {pipeline_mode = #tpu.pipeline_mode<synchronous>, transform_indices = @transform_1, window_bounds = array<i64: 128, 128>}, {pipeline_mode = #tpu.pipeline_mode<synchronous>, transform_indices = @transform_2, window_bounds = array<i64: 1, 128>}, {transform_indices = @transform_3, window_bounds = array<i64: 32, 128>}]} {
    %c0 = arith.constant 0 : index
    %c0_0 = arith.constant 0 : index
    %0 = vector.load %arg1[%c0, %c0_0] : memref<32x128xbf16, #tpu.memory_space<vmem>>, vector<32x128xbf16>
    %c0_1 = arith.constant 0 : index
    %c0_2 = arith.constant 0 : index
    %1 = vector.load %arg2[%c0_1, %c0_2] : memref<128x128xbf16, #tpu.memory_space<vmem>>, vector<128x128xbf16>
    %cst = arith.constant dense<0.000000e+00> : vector<32x128xf32>
    %2 = tpu.matmul %0, %1, %cst {dimension_numbers = #tpu.dot_dimension_numbers<[1], [0], [0], [1], [0, 0, 1, 1], [], []>} : vector<32x128xbf16>, vector<128x128xbf16>, vector<32x128xf32> -> vector<32x128xf32>
    %c0_3 = arith.constant 0 : index
    %c0_4 = arith.constant 0 : index
    %3 = vector.load %arg3[%c0_3, %c0_4] : memref<1x128xf32, #tpu.memory_space<vmem>>, vector<1x128xf32>
    %4 = vector.broadcast %3 : vector<1x128xf32> to vector<32x128xf32>
    %5 = arith.addf %2, %4 : vector<32x128xf32>
    %c0_5 = arith.constant 0 : index
    %c0_6 = arith.constant 0 : index
    %6 = vector.load %arg4[%c0_5, %c0_6] : memref<32x128xf32, #tpu.memory_space<vmem>>, vector<32x128xf32>
    tpu.vector_store %arg4[%c0_5, %c0_6], %5 {strides = array<i32>} : memref<32x128xf32, #tpu.memory_space<vmem>>, vector<32x128xf32>,
    return
  }
  func.func @transform_0(%arg0: i32) -> (i32, i32) {
    %c0_i32 = arith.constant 0 : i32
    %c0_i32_0 = arith.constant 0 : i32
    return %arg0, %c0_i32 : i32, i32
  }
  func.func @transform_1(%arg0: i32) -> (i32, i32) {
    %c0_i32 = arith.constant 0 : i32
    %c0_i32_0 = arith.constant 0 : i32
    %c0_i32_1 = arith.constant 0 : i32
    return %c0_i32, %c0_i32_0 : i32, i32
  }
  func.func @transform_2(%arg0: i32) -> (i32, i32) {
    %c0_i32 = arith.constant 0 : i32
    %c0_i32_0 = arith.constant 0 : i32
    %c0_i32_1 = arith.constant 0 : i32
    return %c0_i32, %c0_i32_0 : i32, i32
  }
  func.func @transform_3(%arg0: i32) -> (i32, i32) {
    %c0_i32 = arith.constant 0 : i32
    %c0_i32_0 = arith.constant 0 : i32
    return %arg0, %c0_i32 : i32, i32
  }
}

</mosaic_0001>

<llo_original>
// kernel: lora_mha_forward.3
$region0: #{lora_mha_forward.3}
  #allocation0 [shape = 'u32[]', space=smem, size = 0x4, offset = 0x4, fixed_abs, tag = 'smem constant byte address 0x4 - core index']
  #allocation1 [shape = 'u32[144,128]{1,0:T(1,128)}', space=vmem, size = 0x12000, scoped, tag = 'internal scratch']
  %s0 = inlined_call_operand.vmem [shape: f32[32,128], index: 0, kind: input, shape index: {}]
  %s1 = inlined_call_operand.vmem [shape: bf16[128,384], index: 1, kind: input, shape index: {}]
  %s2 = inlined_call_operand.vmem [shape: f32[1,384], index: 2, kind: input, shape index: {}]
  %s3 = inlined_call_operand.vmem [shape: bf16[32,384], index: 3, kind: output, shape index: {}]
  %s4 = sld [smem:[#allocation0]]
  $region22: #{lora_mha_forward.3} parent=0
    _
  %s6 = ssub.s32 1, %s4
  %s7 = scalar_select 0, %s6, %s4
  // Predicated region
  $region2: #{lora_mha_forward.3} parent=0 // pred_check
    _
  $region3: #{lora_mha_forward.3} parent=0 // pred_check_branch
    %9 = sbr.rel (0) target = $region5
  $region4: #{lora_mha_forward.3} parent=0 // pred_region
    _
  $region5: #{lora_mha_forward.3} parent=0 // pred_fallthru
    _
  // Predicated region
  $region6: #{lora_mha_forward.3} parent=0 // pred_check
    _
  $region7: #{lora_mha_forward.3} parent=0 // pred_check_branch
    %11 = sbr.rel (0) target = $region9
  $region8: #{lora_mha_forward.3} parent=0 // pred_region
    _
  $region9: #{lora_mha_forward.3} parent=0 // pred_fallthru
    _
  // Predicated region
  $region10: #{lora_mha_forward.3} parent=0 // pred_check
    _
  $region11: #{lora_mha_forward.3} parent=0 // pred_check_branch
    %13 = sbr.rel (0) target = $region13
  $region12: #{lora_mha_forward.3} parent=0 // pred_region
    _
  $region13: #{lora_mha_forward.3} parent=0 // pred_fallthru
    _
  %v15 = vld [vmem:[%s0] sm:$0xff]
  %v16 = vld [vmem:[%s0 + $0x8] sm:$0xff]
  %v17 = vld [vmem:[%s0 + $0x10] sm:$0xff]
  %v18 = vld [vmem:[%s0 + $0x18] sm:$0xff]
  %v19 = vpack.c.bf16 %v16, %v15
  %v20 = vpack.c.bf16 %v18, %v17
  %v21 = vld [vmem:[%s1] sm:$0xff]
  %v22 = vld [vmem:[%s1 + $0x8] sm:$0xf]
  %v23 = vld [vmem:[%s1 + $0xc] sm:$0xff]
  %v24 = vld [vmem:[%s1 + $0x14] sm:$0xf]
  %v25 = vld [vmem:[%s1 + $0x18] sm:$0xff]
  %v26 = vld [vmem:[%s1 + $0x20] sm:$0xf]
  %v27 = vld [vmem:[%s1 + $0x24] sm:$0xff]
  %v28 = vld [vmem:[%s1 + $0x2c] sm:$0xf]
  %v29 = vld [vmem:[%s1 + $0x30] sm:$0xff]
  %v30 = vld [vmem:[%s1 + $0x38] sm:$0xf]
  %v31 = vld [vmem:[%s1 + $0x3c] sm:$0xff]
  %v32 = vld [vmem:[%s1 + $0x44] sm:$0xf]
  %v33 = vld [vmem:[%s1 + $0x48] sm:$0xff]
  %v34 = vld [vmem:[%s1 + $0x50] sm:$0xf]
  %v35 = vld [vmem:[%s1 + $0x54] sm:$0xff]
  %v36 = vld [vmem:[%s1 + $0x5c] sm:$0xf]
  %v37 = vld [vmem:[%s1 + $0x60] sm:$0xff]
  %v38 = vld [vmem:[%s1 + $0x68] sm:$0xf]
  %v39 = vld [vmem:[%s1 + $0x6c] sm:$0xff]
  %v40 = vld [vmem:[%s1 + $0x74] sm:$0xf]
  %v41 = vld [vmem:[%s1 + $0x78] sm:$0xff]
  %v42 = vld [vmem:[%s1 + $0x80] sm:$0xf]
  %v43 = vld [vmem:[%s1 + $0x84] sm:$0xff]
  %v44 = vld [vmem:[%s1 + $0x8c] sm:$0xf]
  %v45 = vld [vmem:[%s1 + $0x90] sm:$0xff]
  %v46 = vld [vmem:[%s1 + $0x98] sm:$0xf]
  %v47 = vld [vmem:[%s1 + $0x9c] sm:$0xff]
  %v48 = vld [vmem:[%s1 + $0xa4] sm:$0xf]
  %v49 = vld [vmem:[%s1 + $0xa8] sm:$0xff]
  %v50 = vld [vmem:[%s1 + $0xb0] sm:$0xf]
  %v51 = vld [vmem:[%s1 + $0xb4] sm:$0xff]
  %v52 = vld [vmem:[%s1 + $0xbc] sm:$0xf]
  %v53 = vld [vmem:[%s2] sm:$0x7]
  %v55 = vlaneseq
  %v56 = vshrl.u32 %v55, 7
  %v57 = vsub.s32 0, %v56
  %v58 = vrot.slane %v53, %v57
  %v59 = vlaneseq
  %v60 = vshrl.u32 %v59, 7
  %v61 = vsub.s32 1, %v60
  %v62 = vrot.slane %v53, %v61
  %v63 = vlaneseq
  %v64 = vshrl.u32 %v63, 7
  %v65 = vsub.s32 2, %v64
  %v66 = vrot.slane %v53, %v65
  %v102 = vunpack.c.l.b16 %v21
  %v103 = vunpack.c.h.b16 %v21
  %v104 = vunpack.c.l.b16 %v22
  %v105 = vunpack.c.l.b16 %v23
  %v106 = vunpack.c.h.b16 %v23
  %v107 = vunpack.c.l.b16 %v24
  %v108 = vunpack.c.l.b16 %v25
  %v109 = vunpack.c.h.b16 %v25
  %v110 = vunpack.c.l.b16 %v26
  %v111 = vunpack.c.l.b16 %v27
  %v112 = vunpack.c.h.b16 %v27
  %v113 = vunpack.c.l.b16 %v28
  %v114 = vunpack.c.l.b16 %v29
  %v115 = vunpack.c.h.b16 %v29
  %v116 = vunpack.c.l.b16 %v30
  %v117 = vunpack.c.l.b16 %v31
  %v118 = vunpack.c.h.b16 %v31
  %v119 = vunpack.c.l.b16 %v32
  %v120 = vunpack.c.l.b16 %v33
  %v121 = vunpack.c.h.b16 %v33
  %v122 = vunpack.c.l.b16 %v34
  %v123 = vunpack.c.l.b16 %v35
  %v124 = vunpack.c.h.b16 %v35
  %v125 = vunpack.c.l.b16 %v36
  %v126 = vunpack.c.l.b16 %v37
  %v127 = vunpack.c.h.b16 %v37
  %v128 = vunpack.c.l.b16 %v38
  %v129 = vunpack.c.l.b16 %v39
  %v130 = vunpack.c.h.b16 %v39
  %v131 = vunpack.c.l.b16 %v40
  %v132 = vunpack.c.l.b16 %v41
  %v133 = vunpack.c.h.b16 %v41
  %v134 = vunpack.c.l.b16 %v42
  %v135 = vunpack.c.l.b16 %v43
  %v136 = vunpack.c.h.b16 %v43
  %v137 = vunpack.c.l.b16 %v44
  %v138 = vunpack.c.l.b16 %v45
  %v139 = vunpack.c.h.b16 %v45
  %v140 = vunpack.c.l.b16 %v46
  %v141 = vunpack.c.l.b16 %v47
  %v142 = vunpack.c.h.b16 %v47
  %v143 = vunpack.c.l.b16 %v48
  %v144 = vunpack.c.l.b16 %v49
  %v145 = vunpack.c.h.b16 %v49
  %v146 = vunpack.c.l.b16 %v50
  %v147 = vunpack.c.l.b16 %v51
  %v148 = vunpack.c.h.b16 %v51
  %v149 = vunpack.c.l.b16 %v52
  %v150 = vpack.c.b16 %v105, %v102
  %v151 = vpack.c.b16 %v106, %v103
  %v152 = vpack.c.b16 %v107, %v104
  %v153 = vpack.c.b16 %v111, %v108
  %v154 = vpack.c.b16 %v112, %v109
  %v155 = vpack.c.b16 %v113, %v110
  %v156 = vpack.c.b16 %v117, %v114
  %v157 = vpack.c.b16 %v118, %v115
  %v158 = vpack.c.b16 %v119, %v116
  %v159 = vpack.c.b16 %v123, %v120
  %v160 = vpack.c.b16 %v124, %v121
  %v161 = vpack.c.b16 %v125, %v122
  %v162 = vpack.c.b16 %v129, %v126
  %v163 = vpack.c.b16 %v130, %v127
  %v164 = vpack.c.b16 %v131, %v128
  %v165 = vpack.c.b16 %v135, %v132
  %v166 = vpack.c.b16 %v136, %v133
  %v167 = vpack.c.b16 %v137, %v134
  %v168 = vpack.c.b16 %v141, %v138
  %v169 = vpack.c.b16 %v142, %v139
  %v170 = vpack.c.b16 %v143, %v140
  %v171 = vpack.c.b16 %v147, %v144
  %v172 = vpack.c.b16 %v148, %v145
  %v173 = vpack.c.b16 %v149, %v146
  %198 = vmatprep.subr.bf16.mxu0 %v151
  %199 = vmatpush1.bf16.msra.mxu0 %v150
  %200 = vmatprep.subr.bf16.mxu0 %v154
  %201 = vmatpush1.bf16.msra.mxu0 %v153
  %202 = vmatprep.subr.bf16.mxu0 %v157
  %203 = vmatpush1.bf16.msra.mxu0 %v156
  %204 = vmatprep.subr.bf16.mxu0 %v160
  %205 = vmatpush1.bf16.msra.mxu0 %v159
  %206 = vmatprep.subr.bf16.mxu0 %v163
  %207 = vmatpush1.bf16.msra.mxu0 %v162
  %208 = vmatprep.subr.bf16.mxu0 %v166
  %209 = vmatpush1.bf16.msra.mxu0 %v165
  %210 = vmatprep.subr.bf16.mxu0 %v169
  %211 = vmatpush1.bf16.msra.mxu0 %v168
  %212 = vmatprep.subr.bf16.mxu0 %v172
  %213 = vmatpush1.bf16.msra.mxu0 %v171
  %214 = vmatprep.subr.bf16.mxu0 0
  %215 = vmatpush1.bf16.msra.mxu0 0
  %216 = vmatprep.subr.bf16.mxu0 0
  %217 = vmatpush1.bf16.msra.mxu0 0
  %218 = vmatprep.subr.bf16.mxu0 0
  %219 = vmatpush1.bf16.msra.mxu0 0
  %220 = vmatprep.subr.bf16.mxu0 0
  %221 = vmatpush1.bf16.msra.mxu0 0
  %222 = vmatprep.subr.bf16.mxu0 0
  %223 = vmatpush1.bf16.msra.mxu0 0
  %224 = vmatprep.subr.bf16.mxu0 0
  %225 = vmatpush1.bf16.msra.mxu0 0
  %226 = vmatprep.subr.bf16.mxu0 0
  %227 = vmatpush1.bf16.msra.mxu0 0
  %228 = vmatprep.subr.bf16.mxu0 0
  %229 = vmatpush1.bf16.msra.mxu0 0
  %230 = vmatprep.mubr.bf16.mxu0 0
  %231 = vmatmul.mubr.bf16.gmra.mrb[0].mxu0 %v19
  %v232 = vpop.f32.mrb[0].mxu0
  %v233 = vadd.f32 %v58, %v232
  %v234 = vpop.f32.mrb[0].mxu0
  %v235 = vadd.f32 %v62, %v234
  %v236 = vpop.f32.mrb[0].mxu0
  %v237 = vadd.f32 %v58, %v236
  %v238 = vpop.f32.mrb[0].mxu0
  %v239 = vadd.f32 %v62, %v238
  %240 = vmatprep.mubr.bf16.mxu0 0
  %241 = vmatmul.mubr.bf16.gmra.mrb[0].mxu0 %v20
  %v242 = vpop.f32.mrb[0].mxu0
  %v243 = vadd.f32 %v58, %v242
  %v244 = vpop.f32.mrb[0].mxu0
  %v245 = vadd.f32 %v62, %v244
  %v246 = vpop.f32.mrb[0].mxu0
  %v247 = vadd.f32 %v58, %v246
  %v248 = vpop.f32.mrb[0].mxu0
  %v249 = vadd.f32 %v62, %v248
  %250 = vdwg.mxu0
  %251 = vmatprep.subr.bf16.mxu0 0
  %252 = vmatpush1.bf16.msra.mxu0 %v152
  %253 = vmatprep.subr.bf16.mxu0 0
  %254 = vmatpush1.bf16.msra.mxu0 %v155
  %255 = vmatprep.subr.bf16.mxu0 0
  %256 = vmatpush1.bf16.msra.mxu0 %v158
  %257 = vmatprep.subr.bf16.mxu0 0
  %258 = vmatpush1.bf16.msra.mxu0 %v161
  %259 = vmatprep.subr.bf16.mxu0 0
  %260 = vmatpush1.bf16.msra.mxu0 %v164
  %261 = vmatprep.subr.bf16.mxu0 0
  %262 = vmatpush1.bf16.msra.mxu0 %v167
  %263 = vmatprep.subr.bf16.mxu0 0
  %264 = vmatpush1.bf16.msra.mxu0 %v170
  %265 = vmatprep.subr.bf16.mxu0 0
  %266 = vmatpush1.bf16.msra.mxu0 %v173
  %267 = vmatprep.subr.bf16.mxu0 0
  %268 = vmatpush1.bf16.msra.mxu0 0
  %269 = vmatprep.subr.bf16.mxu0 0
  %270 = vmatpush1.bf16.msra.mxu0 0
  %271 = vmatprep.subr.bf16.mxu0 0
  %272 = vmatpush1.bf16.msra.mxu0 0
  %273 = vmatprep.subr.bf16.mxu0 0
  %274 = vmatpush1.bf16.msra.mxu0 0
  %275 = vmatprep.subr.bf16.mxu0 0
  %276 = vmatpush1.bf16.msra.mxu0 0
  %277 = vmatprep.subr.bf16.mxu0 0
  %278 = vmatpush1.bf16.msra.mxu0 0
  %279 = vmatprep.subr.bf16.mxu0 0
  %280 = vmatpush1.bf16.msra.mxu0 0
  %281 = vmatprep.subr.bf16.mxu0 0
  %282 = vmatpush1.bf16.msra.mxu0 0
  %283 = vmatprep.mubr.bf16.mxu0 0
  %284 = vmatmul.mubr.bf16.gmra.mrb[0].mxu0 %v19
  %v285 = vpop.f32.mrb[0].mxu0
  %v286 = vadd.f32 %v66, %v285
  %v287 = vpop.f32.mrb[0].mxu0
  %v288 = vpop.f32.mrb[0].mxu0
  %v289 = vadd.f32 %v66, %v288
  %v290 = vpop.f32.mrb[0].mxu0
  %291 = vmatprep.mubr.bf16.mxu0 0
  %292 = vmatmul.mubr.bf16.gmra.mrb[0].mxu0 %v20
  %v293 = vpop.f32.mrb[0].mxu0
  %v294 = vadd.f32 %v66, %v293
  %v295 = vpop.f32.mrb[0].mxu0
  %v296 = vpop.f32.mrb[0].mxu0
  %v297 = vadd.f32 %v66, %v296
  %v298 = vpop.f32.mrb[0].mxu0
  %299 = vdwg.mxu0
  %v300 = vpack.c.bf16 %v237, %v233
  %v301 = vpack.c.bf16 %v239, %v235
  %v302 = vpack.c.bf16 %v289, %v286
  %v303 = vpack.c.bf16 %v247, %v243
  %v304 = vpack.c.bf16 %v249, %v245
  %v305 = vpack.c.bf16 %v297, %v294
  %v312 = vunpack.c.l.b16 %v300
  %v313 = vunpack.c.l.b16 %v301
  %v314 = vunpack.c.l.b16 %v302
  %v315 = vunpack.c.h.b16 %v300
  %v316 = vunpack.c.h.b16 %v301
  %v317 = vunpack.c.h.b16 %v302
  %v318 = vunpack.c.l.b16 %v303
  %v319 = vunpack.c.l.b16 %v304
  %v320 = vunpack.c.l.b16 %v305
  %v321 = vunpack.c.h.b16 %v303
  %v322 = vunpack.c.h.b16 %v304
  %v323 = vunpack.c.h.b16 %v305
  %v324 = vpack.c.b16 %v313, %v312
  %v325 = vpack.c.b16 %v314, %v314
  %v326 = vpack.c.b16 %v316, %v315
  %v327 = vpack.c.b16 %v317, %v317
  %v328 = vpack.c.b16 %v319, %v318
  %v329 = vpack.c.b16 %v320, %v320
  %v330 = vpack.c.b16 %v322, %v321
  %v331 = vpack.c.b16 %v323, %v323
  %340 = vst [vmem:[%s3] sm:$0xff] %v324
  %341 = vst [vmem:[%s3 + $0x8] sm:$0xf] %v325
  %342 = vst [vmem:[%s3 + $0xc] sm:$0xff] %v326
  %343 = vst [vmem:[%s3 + $0x14] sm:$0xf] %v327
  %344 = vst [vmem:[%s3 + $0x18] sm:$0xff] %v328
  %345 = vst [vmem:[%s3 + $0x20] sm:$0xf] %v329
  %346 = vst [vmem:[%s3 + $0x24] sm:$0xff] %v330
  %347 = vst [vmem:[%s3 + $0x2c] sm:$0xf] %v331
  // Predicated region
  $region14: #{lora_mha_forward.3} parent=0 // pred_check
    _
  $region15: #{lora_mha_forward.3} parent=0 // pred_check_branch
    %349 = sbr.rel (0) target = $region17
  $region16: #{lora_mha_forward.3} parent=0 // pred_region
    _
  $region17: #{lora_mha_forward.3} parent=0 // pred_fallthru
    _
  // Predicated region
  $region18: #{lora_mha_forward.3} parent=0 // pred_check
    _
  $region19: #{lora_mha_forward.3} parent=0 // pred_check_branch
    %351 = sbr.rel (0) target = $region21
  $region20: #{lora_mha_forward.3} parent=0 // pred_region
    _
  $region21: #{lora_mha_forward.3} parent=0 // pred_fallthru
    _

// kernel: lora_mha_forward.4
$region0: #{lora_mha_forward.4}
  #allocation0 [shape = 'u32[]', space=smem, size = 0x4, offset = 0x4, fixed_abs, tag = 'smem constant byte address 0x4 - core index']
  #allocation1 [shape = 'u32[144,128]{1,0:T(1,128)}', space=vmem, size = 0x12000, scoped, tag = 'internal scratch']
  %s0 = inlined_call_operand.vmem [shape: bf16[2,16,384], index: 0, kind: input, shape index: {}, may-alias: {0,1,2}]
  %s1 = inlined_call_operand.vmem [shape: bf16[2,16,384], index: 1, kind: input, shape index: {}, may-alias: {0,1,2}]
  %s2 = inlined_call_operand.vmem [shape: bf16[2,16,384], index: 2, kind: input, shape index: {}, may-alias: {0,1,2}]
  %s3 = inlined_call_operand.vmem [shape: f32[2,1,16], index: 3, kind: input, shape index: {}]
  %s4 = inlined_call_operand.vmem [shape: bf16[2,16,128], index: 4, kind: output, shape index: {}]
  %s5 = sld [smem:[#allocation0]]
  $region172: #{lora_mha_forward.4} parent=0
    _
  %s7 = ssub.s32 1, %s5
  %s8 = scalar_select 0, %s7, %s5
  $region1: #{lora_mha_forward.4} parent=0
    #allocation2 [shape = 'u8[8192]{0}', space=vmem, size = 0x2000, scoped, tag = 'input window, operand 0']
    #allocation3 [shape = 'u8[8192]{0}', space=vmem, size = 0x2000, scoped, tag = 'input window, operand 1']
    #allocation4 [shape = 'u8[8192]{0}', space=vmem, size = 0x2000, scoped, tag = 'input window, operand 2']
    loop: start=0, step=1, limit=4
    $region2: #{lora_mha_forward.4} parent=1 // loop_pre_header
      _
    $region3: #{lora_mha_forward.4} parent=1 // loop_header
      %s10 = sphi 0, %s14
      %p11 = scmp.ge.s32.totalorder %s10, 4
      %s17 = sphi 0, %s29
      %s18 = sphi 0, %s25
      %s19 = sphi 0, %s17
      %s20 = sphi 0, %s18
      %s21 = sphi 0, %s19
      %s22 = sphi 0, %s20
      %s34 = sphi 0, %s36
      %s37 = sphi 0, %s34
      %s38 = sphi 0, %s37
      %s54 = sphi 0, %s38
      %s60 = sphi 0, %s62
      %s63 = sphi 0, %s60
      %s64 = sphi 0, %s63
      %s80 = sphi 0, %s64
      %s86 = sphi 0, %s88
      %s89 = sphi 0, %s86
      %s90 = sphi 0, %s89
      %s106 = sphi 0, %s90
      %s112 = sphi 0, %s114
      %s115 = sphi 0, %s112
      %s116 = sphi 0, %s115
      %s132 = sphi 0, %s116
      %s140 = sphi 0, %s142
      %s143 = sphi 0, %s140
      %s144 = sphi 0, %s143
      %s160 = sphi 0, %s144
    $region4: #{lora_mha_forward.4} parent=1 // loop_header_branch
      %13 = sbr.rel (%p11) target = $region8
    $region5: #{lora_mha_forward.4} parent=1 // loop_body
      %s15 = ssub.s32 %s10, 1
      %s16 = ssub.s32 %s10, 2
      %s23 = sadd.s32 1, %s18
      %p24 = scmp.ge.s32.totalorder %s23, 1
      %s25 = scalar_select %p24, 0, %s23
      %s26 = sadd.s32 1, %s17
      %s27 = scalar_select %p24, %s26, %s17
      %p28 = scmp.ge.s32.totalorder %s27, 2
      %s29 = scalar_select %p28, 0, %s27
      %s30 = ssub.s32 %s17, %s29
      %s31 = ssub.s32 %s18, %s25
      %s32 = sor.u32 %s30, %s31
      %p33 = scmp.eq.s32.totalorder %s32, 0
      %s35 = sadd.s32 %s34, 1
      %s36 = scalar_select %p33, %s34, %s35
      %p39 = pneg %p33
      %p40 = scmp.eq.s32.totalorder %s10, 1
      %p41 = por %p39, %p40
      %p42 = scmp.ne.s32.totalorder %s34, %s37
      %p43 = scmp.eq.s32.totalorder %s10, 0
      %p44 = por %p42, %p43
      %p45 = scmp.ne.s32.totalorder %s34, %s37
      %p46 = scmp.eq.s32.totalorder %s15, 1
      %p47 = por %p45, %p46
      %p48 = scmp.ne.s32.totalorder %s37, %s38
      %p49 = scmp.eq.s32.totalorder %s15, 0
      %p50 = por %p48, %p49
      %p51 = scmp.ne.s32.totalorder %s37, %s38
      %p52 = scmp.eq.s32.totalorder %s16, 1
      %p53 = por %p51, %p52
      %p55 = scmp.ne.s32.totalorder %s38, %s54
      %p56 = scmp.eq.s32.totalorder %s16, 0
      %p57 = por %p55, %p56
      %s58 = ssub.s32 %s17, %s29
      %p59 = scmp.eq.s32.totalorder %s58, 0
      %s61 = sadd.s32 %s60, 1
      %s62 = scalar_select %p59, %s60, %s61
      %p65 = pneg %p59
      %p66 = scmp.eq.s32.totalorder %s10, 1
      %p67 = por %p65, %p66
      %p68 = scmp.ne.s32.totalorder %s60, %s63
      %p69 = scmp.eq.s32.totalorder %s10, 0
      %p70 = por %p68, %p69
      %p71 = scmp.ne.s32.totalorder %s60, %s63
      %p72 = scmp.eq.s32.totalorder %s15, 1
      %p73 = por %p71, %p72
      %p74 = scmp.ne.s32.totalorder %s63, %s64
      %p75 = scmp.eq.s32.totalorder %s15, 0
      %p76 = por %p74, %p75
      %p77 = scmp.ne.s32.totalorder %s63, %s64
      %p78 = scmp.eq.s32.totalorder %s16, 1
      %p79 = por %p77, %p78
      %p81 = scmp.ne.s32.totalorder %s64, %s80
      %p82 = scmp.eq.s32.totalorder %s16, 0
      %p83 = por %p81, %p82
      %s84 = ssub.s32 %s17, %s29
      %p85 = scmp.eq.s32.totalorder %s84, 0
      %s87 = sadd.s32 %s86, 1
      %s88 = scalar_select %p85, %s86, %s87
      %p91 = pneg %p85
      %p92 = scmp.eq.s32.totalorder %s10, 1
      %p93 = por %p91, %p92
      %p94 = scmp.ne.s32.totalorder %s86, %s89
      %p95 = scmp.eq.s32.totalorder %s10, 0
      %p96 = por %p94, %p95
      %p97 = scmp.ne.s32.totalorder %s86, %s89
      %p98 = scmp.eq.s32.totalorder %s15, 1
      %p99 = por %p97, %p98
      %p100 = scmp.ne.s32.totalorder %s89, %s90
      %p101 = scmp.eq.s32.totalorder %s15, 0
      %p102 = por %p100, %p101
      %p103 = scmp.ne.s32.totalorder %s89, %s90
      %p104 = scmp.eq.s32.totalorder %s16, 1
      %p105 = por %p103, %p104
      %p107 = scmp.ne.s32.totalorder %s90, %s106
      %p108 = scmp.eq.s32.totalorder %s16, 0
      %p109 = por %p107, %p108
      %s110 = ssub.s32 %s17, %s29
      %p111 = scmp.eq.s32.totalorder %s110, 0
      %s113 = sadd.s32 %s112, 1
      %s114 = scalar_select %p111, %s112, %s113
      %p117 = pneg %p111
      %p118 = scmp.eq.s32.totalorder %s10, 1
      %p119 = por %p117, %p118
      %p120 = scmp.ne.s32.totalorder %s112, %s115
      %p121 = scmp.eq.s32.totalorder %s10, 0
      %p122 = por %p120, %p121
      %p123 = scmp.ne.s32.totalorder %s112, %s115
      %p124 = scmp.eq.s32.totalorder %s15, 1
      %p125 = por %p123, %p124
      %p126 = scmp.ne.s32.totalorder %s115, %s116
      %p127 = scmp.eq.s32.totalorder %s15, 0
      %p128 = por %p126, %p127
      %p129 = scmp.ne.s32.totalorder %s115, %s116
      %p130 = scmp.eq.s32.totalorder %s16, 1
      %p131 = por %p129, %p130
      %p133 = scmp.ne.s32.totalorder %s116, %s132
      %p134 = scmp.eq.s32.totalorder %s16, 0
      %p135 = por %p133, %p134
      %s136 = ssub.s32 %s17, %s29
      %s137 = ssub.s32 %s18, %s25
      %s138 = sor.u32 %s136, %s137
      %p139 = scmp.eq.s32.totalorder %s138, 0
      %s141 = sadd.s32 %s140, 1
      %s142 = scalar_select %p139, %s140, %s141
      %p145 = pneg %p139
      %p146 = scmp.eq.s32.totalorder %s10, 1
      %p147 = por %p145, %p146
      %p148 = scmp.ne.s32.totalorder %s140, %s143
      %p149 = scmp.eq.s32.totalorder %s10, 0
      %p150 = por %p148, %p149
      %p151 = scmp.ne.s32.totalorder %s140, %s143
      %p152 = scmp.eq.s32.totalorder %s15, 1
      %p153 = por %p151, %p152
      %p154 = scmp.ne.s32.totalorder %s143, %s144
      %p155 = scmp.eq.s32.totalorder %s15, 0
      %p156 = por %p154, %p155
      %p157 = scmp.ne.s32.totalorder %s143, %s144
      %p158 = scmp.eq.s32.totalorder %s16, 1
      %p159 = por %p157, %p158
      %p161 = scmp.ne.s32.totalorder %s144, %s160
      %p162 = scmp.eq.s32.totalorder %s16, 0
      %p163 = por %p161, %p162
      %p164 = scmp.le.s32.totalorder 1, %s10
      %p165 = scmp.lt.s32.totalorder %s10, 3
      %p166 = pnand %p164, %p165
      %p167 = pneg %p166
      // Predicated region
      $region9: #{lora_mha_forward.4} parent=5 // pred_check
        _
      $region10: #{lora_mha_forward.4} parent=5 // pred_check_branch
        %169 = sbr.rel (%p166) target = $region12
      $region11: #{lora_mha_forward.4} parent=5 // pred_region
        %s170 = ssub.s32 %s10, 1
      $region12: #{lora_mha_forward.4} parent=5 // pred_fallthru
        _
      %p171 = scmp.lt.s32.totalorder %s10, 2
      // Predicated region
      $region13: #{lora_mha_forward.4} parent=5 // pred_check
        %p172 = pneg %p171
      $region14: #{lora_mha_forward.4} parent=5 // pred_check_branch
        %174 = sbr.rel (%p172) target = $region16
      $region15: #{lora_mha_forward.4} parent=5 // pred_region
        // Predicated region
        $region17: #{lora_mha_forward.4} parent=15 // pred_check
          %p175 = pneg %p44
        $region18: #{lora_mha_forward.4} parent=15 // pred_check_branch
          %177 = sbr.rel (%p175) target = $region20
        $region19: #{lora_mha_forward.4} parent=15 // pred_region
          %s178 = sand.u32 %s34, 1
          %s179 = sand.u32 %s34, 1
          %s180 = smul.addr %s179, 8
          %s181 = scalar_lea.vmem [#allocation2], %s180
          %s182 = smul.u32 2, %s18
          %s183 = smul.addr %s182, 3
          %s184 = smul.addr %s17, 6
          %s185 = sadd.s32 %s183, %s184
          %s186 = smul.addr %s185, 4
          %s187 = scalar_lea.vmem %s0, %s186
          // Predicated region
          $region21: #{lora_mha_forward.4} parent=19 // pred_check
            _
          $region22: #{lora_mha_forward.4} parent=19 // pred_check_branch
            %189 = sbr.rel (0) target = $region24
          $region23: #{lora_mha_forward.4} parent=19 // pred_region
            // Predicated region
            $region25: #{lora_mha_forward.4} parent=23 // pred_check
              _
            $region26: #{lora_mha_forward.4} parent=23 // pred_check_branch
              %191 = sbr.rel target = $region28
            $region27: #{lora_mha_forward.4} parent=23 // pred_region
              // Predicated region
              $region40: #{lora_mha_forward.4} parent=27 // pred_check
                _
              $region41: #{lora_mha_forward.4} parent=27 // pred_check_branch
                %208 = sbr.rel (0) target = $region43
              $region42: #{lora_mha_forward.4} parent=27 // pred_region
                loop: start=0, step=1, limit=1
                $region44: #{lora_mha_forward.4} parent=42 // loop_pre_header
                  _
                $region45: #{lora_mha_forward.4} parent=42 // loop_header
                  %s210 = sphi 0, %s214
                  %p211 = scmp.ge.s32.totalorder %s210, 1
                  %s215 = sphi %s187, %s187
                  %s216 = sphi %s181, %s181
                $region46: #{lora_mha_forward.4} parent=42 // loop_header_branch
                  %213 = sbr.rel (%p211) target = $region50
                $region47: #{lora_mha_forward.4} parent=42 // loop_body
                  _
                $region48: #{lora_mha_forward.4} parent=42 // loop_footer
                  %s214 = sadd.s32 1, %s210
                $region49: #{lora_mha_forward.4} parent=42 // loop_footer_branch
                  %209 = sbr.rel target = $region45
                $region50: #{lora_mha_forward.4} parent=42 // loop_exit
                  _
                loop: start=0, step=1, limit=1
                $region51: #{lora_mha_forward.4} parent=42 // loop_pre_header
                  _
                $region52: #{lora_mha_forward.4} parent=42 // loop_header
                  %s219 = sphi 0, %s223
                  %p220 = scmp.ge.s32.totalorder %s219, 1
                  %s224 = sphi %s187, %s187
                  %s225 = sphi %s181, %s181
                $region53: #{lora_mha_forward.4} parent=42 // loop_header_branch
                  %222 = sbr.rel (%p220) target = $region57
                $region54: #{lora_mha_forward.4} parent=42 // loop_body
                  %v226 = vld [vmem:[%s224] sm:$0xf]
                  %227 = vst [vmem:[%s225] sm:$0xf] %v226
                  %v228 = vld [vmem:[%s224 + $0xc] sm:$0xf]
                  %229 = vst [vmem:[%s225 + $0x4] sm:$0xf] %v228
                $region55: #{lora_mha_forward.4} parent=42 // loop_footer
                  %s223 = sadd.s32 1, %s219
                $region56: #{lora_mha_forward.4} parent=42 // loop_footer_branch
                  %218 = sbr.rel target = $region52
                $region57: #{lora_mha_forward.4} parent=42 // loop_exit
                  _
              $region43: #{lora_mha_forward.4} parent=27 // pred_fallthru
                _
            $region28: #{lora_mha_forward.4} parent=23 // pred_fallthru
              _
            // Predicated region
            $region29: #{lora_mha_forward.4} parent=23 // pred_check
              _
            $region30: #{lora_mha_forward.4} parent=23 // pred_check_branch
              %193 = sbr.rel (0) target = $region32
            $region31: #{lora_mha_forward.4} parent=23 // pred_region
              loop: start=0, step=1, limit=1
              $region33: #{lora_mha_forward.4} parent=31 // loop_pre_header
                _
              $region34: #{lora_mha_forward.4} parent=31 // loop_header
                %s196 = sphi 0, %s200
                %p197 = scmp.ge.s32.totalorder %s196, 1
                %s201 = sphi %s187, %s187
                %s202 = sphi %s181, %s181
              $region35: #{lora_mha_forward.4} parent=31 // loop_header_branch
                %199 = sbr.rel (%p197) target = $region39
              $region36: #{lora_mha_forward.4} parent=31 // loop_body
                %v203 = vld [vmem:[%s201] sm:$0xf]
                %204 = vst [vmem:[%s202] sm:$0xf] %v203
                %v205 = vld [vmem:[%s201 + $0xc] sm:$0xf]
                %206 = vst [vmem:[%s202 + $0x4] sm:$0xf] %v205
              $region37: #{lora_mha_forward.4} parent=31 // loop_footer
                %s200 = sadd.s32 1, %s196
              $region38: #{lora_mha_forward.4} parent=31 // loop_footer_branch
                %195 = sbr.rel target = $region34
              $region39: #{lora_mha_forward.4} parent=31 // loop_exit
                _
            $region32: #{lora_mha_forward.4} parent=23 // pred_fallthru
              _
          $region24: #{lora_mha_forward.4} parent=19 // pred_fallthru
            _
          %230 = vnop
        $region20: #{lora_mha_forward.4} parent=15 // pred_fallthru
          _
        // Predicated region
        $region58: #{lora_mha_forward.4} parent=15 // pred_check
          %p231 = pneg %p70
        $region59: #{lora_mha_forward.4} parent=15 // pred_check_branch
          %233 = sbr.rel (%p231) target = $region61
        $region60: #{lora_mha_forward.4} parent=15 // pred_region
          %s234 = sand.u32 %s60, 1
          %s235 = sand.u32 %s60, 1
          %s236 = smul.addr %s235, 8
          %s237 = scalar_lea.vmem [#allocation3], %s236
          %s238 = smul.addr %s17, 6
          %s239 = sadd.s32 1, %s238
          %s240 = smul.addr %s239, 4
          %s241 = scalar_lea.vmem %s1, %s240
          // Predicated region
          $region62: #{lora_mha_forward.4} parent=60 // pred_check
            _
          $region63: #{lora_mha_forward.4} parent=60 // pred_check_branch
            %243 = sbr.rel (0) target = $region65
          $region64: #{lora_mha_forward.4} parent=60 // pred_region
            // Predicated region
            $region66: #{lora_mha_forward.4} parent=64 // pred_check
              _
            $region67: #{lora_mha_forward.4} parent=64 // pred_check_branch
              %245 = sbr.rel target = $region69
            $region68: #{lora_mha_forward.4} parent=64 // pred_region
              // Predicated region
              $region81: #{lora_mha_forward.4} parent=68 // pred_check
                _
              $region82: #{lora_mha_forward.4} parent=68 // pred_check_branch
                %262 = sbr.rel (0) target = $region84
              $region83: #{lora_mha_forward.4} parent=68 // pred_region
                loop: start=0, step=1, limit=1
                $region85: #{lora_mha_forward.4} parent=83 // loop_pre_header
                  _
                $region86: #{lora_mha_forward.4} parent=83 // loop_header
                  %s264 = sphi 0, %s268
                  %p265 = scmp.ge.s32.totalorder %s264, 1
                  %s269 = sphi %s241, %s241
                  %s270 = sphi %s237, %s237
                $region87: #{lora_mha_forward.4} parent=83 // loop_header_branch
                  %267 = sbr.rel (%p265) target = $region91
                $region88: #{lora_mha_forward.4} parent=83 // loop_body
                  _
                $region89: #{lora_mha_forward.4} parent=83 // loop_footer
                  %s268 = sadd.s32 1, %s264
                $region90: #{lora_mha_forward.4} parent=83 // loop_footer_branch
                  %263 = sbr.rel target = $region86
                $region91: #{lora_mha_forward.4} parent=83 // loop_exit
                  _
                loop: start=0, step=1, limit=1
                $region92: #{lora_mha_forward.4} parent=83 // loop_pre_header
                  _
                $region93: #{lora_mha_forward.4} parent=83 // loop_header
                  %s273 = sphi 0, %s277
                  %p274 = scmp.ge.s32.totalorder %s273, 1
                  %s278 = sphi %s241, %s241
                  %s279 = sphi %s237, %s237
                $region94: #{lora_mha_forward.4} parent=83 // loop_header_branch
                  %276 = sbr.rel (%p274) target = $region98
                $region95: #{lora_mha_forward.4} parent=83 // loop_body
                  %v280 = vld [vmem:[%s278] sm:$0xf]
                  %281 = vst [vmem:[%s279] sm:$0xf] %v280
                  %v282 = vld [vmem:[%s278 + $0xc] sm:$0xf]
                  %283 = vst [vmem:[%s279 + $0x4] sm:$0xf] %v282
                $region96: #{lora_mha_forward.4} parent=83 // loop_footer
                  %s277 = sadd.s32 1, %s273
                $region97: #{lora_mha_forward.4} parent=83 // loop_footer_branch
                  %272 = sbr.rel target = $region93
                $region98: #{lora_mha_forward.4} parent=83 // loop_exit
                  _
              $region84: #{lora_mha_forward.4} parent=68 // pred_fallthru
                _
            $region69: #{lora_mha_forward.4} parent=64 // pred_fallthru
              _
            // Predicated region
            $region70: #{lora_mha_forward.4} parent=64 // pred_check
              _
            $region71: #{lora_mha_forward.4} parent=64 // pred_check_branch
              %247 = sbr.rel (0) target = $region73
            $region72: #{lora_mha_forward.4} parent=64 // pred_region
              loop: start=0, step=1, limit=1
              $region74: #{lora_mha_forward.4} parent=72 // loop_pre_header
                _
              $region75: #{lora_mha_forward.4} parent=72 // loop_header
                %s250 = sphi 0, %s254
                %p251 = scmp.ge.s32.totalorder %s250, 1
                %s255 = sphi %s241, %s241
                %s256 = sphi %s237, %s237
              $region76: #{lora_mha_forward.4} parent=72 // loop_header_branch
                %253 = sbr.rel (%p251) target = $region80
              $region77: #{lora_mha_forward.4} parent=72 // loop_body
                %v257 = vld [vmem:[%s255] sm:$0xf]
                %258 = vst [vmem:[%s256] sm:$0xf] %v257
                %v259 = vld [vmem:[%s255 + $0xc] sm:$0xf]
                %260 = vst [vmem:[%s256 + $0x4] sm:$0xf] %v259
              $region78: #{lora_mha_forward.4} parent=72 // loop_footer
                %s254 = sadd.s32 1, %s250
              $region79: #{lora_mha_forward.4} parent=72 // loop_footer_branch
                %249 = sbr.rel target = $region75
              $region80: #{lora_mha_forward.4} parent=72 // loop_exit
                _
            $region73: #{lora_mha_forward.4} parent=64 // pred_fallthru
              _
          $region65: #{lora_mha_forward.4} parent=60 // pred_fallthru
            _
          %284 = vnop
        $region61: #{lora_mha_forward.4} parent=15 // pred_fallthru
          _
        // Predicated region
        $region99: #{lora_mha_forward.4} parent=15 // pred_check
          %p285 = pneg %p96
        $region100: #{lora_mha_forward.4} parent=15 // pred_check_branch
          %287 = sbr.rel (%p285) target = $region102
        $region101: #{lora_mha_forward.4} parent=15 // pred_region
          %s288 = sand.u32 %s86, 1
          %s289 = sand.u32 %s86, 1
          %s290 = smul.addr %s289, 8
          %s291 = scalar_lea.vmem [#allocation4], %s290
          %s292 = smul.addr %s17, 6
          %s293 = sadd.s32 2, %s292
          %s294 = smul.addr %s293, 4
          %s295 = scalar_lea.vmem %s2, %s294
          // Predicated region
          $region103: #{lora_mha_forward.4} parent=101 // pred_check
            _
          $region104: #{lora_mha_forward.4} parent=101 // pred_check_branch
            %297 = sbr.rel (0) target = $region106
          $region105: #{lora_mha_forward.4} parent=101 // pred_region
            // Predicated region
            $region107: #{lora_mha_forward.4} parent=105 // pred_check
              _
            $region108: #{lora_mha_forward.4} parent=105 // pred_check_branch
              %299 = sbr.rel target = $region110
            $region109: #{lora_mha_forward.4} parent=105 // pred_region
              // Predicated region
              $region122: #{lora_mha_forward.4} parent=109 // pred_check
                _
              $region123: #{lora_mha_forward.4} parent=109 // pred_check_branch
                %316 = sbr.rel (0) target = $region125
              $region124: #{lora_mha_forward.4} parent=109 // pred_region
                loop: start=0, step=1, limit=1
                $region126: #{lora_mha_forward.4} parent=124 // loop_pre_header
                  _
                $region127: #{lora_mha_forward.4} parent=124 // loop_header
                  %s318 = sphi 0, %s322
                  %p319 = scmp.ge.s32.totalorder %s318, 1
                  %s323 = sphi %s295, %s295
                  %s324 = sphi %s291, %s291
                $region128: #{lora_mha_forward.4} parent=124 // loop_header_branch
                  %321 = sbr.rel (%p319) target = $region132
                $region129: #{lora_mha_forward.4} parent=124 // loop_body
                  _
                $region130: #{lora_mha_forward.4} parent=124 // loop_footer
                  %s322 = sadd.s32 1, %s318
                $region131: #{lora_mha_forward.4} parent=124 // loop_footer_branch
                  %317 = sbr.rel target = $region127
                $region132: #{lora_mha_forward.4} parent=124 // loop_exit
                  _
                loop: start=0, step=1, limit=1
                $region133: #{lora_mha_forward.4} parent=124 // loop_pre_header
                  _
                $region134: #{lora_mha_forward.4} parent=124 // loop_header
                  %s327 = sphi 0, %s331
                  %p328 = scmp.ge.s32.totalorder %s327, 1
                  %s332 = sphi %s295, %s295
                  %s333 = sphi %s291, %s291
                $region135: #{lora_mha_forward.4} parent=124 // loop_header_branch
                  %330 = sbr.rel (%p328) target = $region139
                $region136: #{lora_mha_forward.4} parent=124 // loop_body
                  %v334 = vld [vmem:[%s332] sm:$0xf]
                  %335 = vst [vmem:[%s333] sm:$0xf] %v334
                  %v336 = vld [vmem:[%s332 + $0xc] sm:$0xf]
                  %337 = vst [vmem:[%s333 + $0x4] sm:$0xf] %v336
                $region137: #{lora_mha_forward.4} parent=124 // loop_footer
                  %s331 = sadd.s32 1, %s327
                $region138: #{lora_mha_forward.4} parent=124 // loop_footer_branch
                  %326 = sbr.rel target = $region134
                $region139: #{lora_mha_forward.4} parent=124 // loop_exit
                  _
              $region125: #{lora_mha_forward.4} parent=109 // pred_fallthru
                _
            $region110: #{lora_mha_forward.4} parent=105 // pred_fallthru
              _
            // Predicated region
            $region111: #{lora_mha_forward.4} parent=105 // pred_check
              _
            $region112: #{lora_mha_forward.4} parent=105 // pred_check_branch
              %301 = sbr.rel (0) target = $region114
            $region113: #{lora_mha_forward.4} parent=105 // pred_region
              loop: start=0, step=1, limit=1
              $region115: #{lora_mha_forward.4} parent=113 // loop_pre_header
                _
              $region116: #{lora_mha_forward.4} parent=113 // loop_header
                %s304 = sphi 0, %s308
                %p305 = scmp.ge.s32.totalorder %s304, 1
                %s309 = sphi %s295, %s295
                %s310 = sphi %s291, %s291
              $region117: #{lora_mha_forward.4} parent=113 // loop_header_branch
                %307 = sbr.rel (%p305) target = $region121
              $region118: #{lora_mha_forward.4} parent=113 // loop_body
                %v311 = vld [vmem:[%s309] sm:$0xf]
                %312 = vst [vmem:[%s310] sm:$0xf] %v311
                %v313 = vld [vmem:[%s309 + $0xc] sm:$0xf]
                %314 = vst [vmem:[%s310 + $0x4] sm:$0xf] %v313
              $region119: #{lora_mha_forward.4} parent=113 // loop_footer
                %s308 = sadd.s32 1, %s304
              $region120: #{lora_mha_forward.4} parent=113 // loop_footer_branch
                %303 = sbr.rel target = $region116
              $region121: #{lora_mha_forward.4} parent=113 // loop_exit
                _
            $region114: #{lora_mha_forward.4} parent=105 // pred_fallthru
              _
          $region106: #{lora_mha_forward.4} parent=101 // pred_fallthru
            _
          %338 = vnop
        $region102: #{lora_mha_forward.4} parent=15 // pred_fallthru
          _
        // Predicated region
        $region140: #{lora_mha_forward.4} parent=15 // pred_check
          %p339 = pneg %p122
        $region141: #{lora_mha_forward.4} parent=15 // pred_check_branch
          %341 = sbr.rel (%p339) target = $region143
        $region142: #{lora_mha_forward.4} parent=15 // pred_region
          %p342 = scmp.lt.s32.totalorder %s17, 1
          %s343 = scalar_select %p342, %s17, 1
          %s344 = scalar_lea.vmem %s3, %s343
        $region143: #{lora_mha_forward.4} parent=15 // pred_fallthru
          _
      $region16: #{lora_mha_forward.4} parent=5 // pred_fallthru
        _
      %p345 = scmp.le.s32.totalorder 1, %s10
      %p346 = scmp.lt.s32.totalorder %s10, 3
      %p347 = pnand %p345, %p346
      %p348 = pneg %p347
      // Predicated region
      $region144: #{lora_mha_forward.4} parent=5 // pred_check
        _
      $region145: #{lora_mha_forward.4} parent=5 // pred_check_branch
        %350 = sbr.rel (%p347) target = $region147
      $region146: #{lora_mha_forward.4} parent=5 // pred_region
        %s351 = ssub.s32 %s10, 1
        %s352 = sand.u32 %s37, 1
        %s353 = sand.u32 %s37, 1
        %s354 = smul.addr %s353, 8
        %s355 = scalar_lea.vmem [#allocation2], %s354
        // Predicated region
        $region148: #{lora_mha_forward.4} parent=146 // pred_check
          %p356 = pneg %p50
        $region149: #{lora_mha_forward.4} parent=146 // pred_check_branch
          %358 = sbr.rel (%p356) target = $region151
        $region150: #{lora_mha_forward.4} parent=146 // pred_region
          _
        $region151: #{lora_mha_forward.4} parent=146 // pred_fallthru
          _
        %s359 = sand.u32 %s63, 1
        %s360 = sand.u32 %s63, 1
        %s361 = smul.addr %s360, 8
        %s362 = scalar_lea.vmem [#allocation3], %s361
        // Predicated region
        $region152: #{lora_mha_forward.4} parent=146 // pred_check
          %p363 = pneg %p76
        $region153: #{lora_mha_forward.4} parent=146 // pred_check_branch
          %365 = sbr.rel (%p363) target = $region155
        $region154: #{lora_mha_forward.4} parent=146 // pred_region
          _
        $region155: #{lora_mha_forward.4} parent=146 // pred_fallthru
          _
        %s366 = sand.u32 %s89, 1
        %s367 = sand.u32 %s89, 1
        %s368 = smul.addr %s367, 8
        %s369 = scalar_lea.vmem [#allocation4], %s368
        // Predicated region
        $region156: #{lora_mha_forward.4} parent=146 // pred_check
          %p370 = pneg %p102
        $region157: #{lora_mha_forward.4} parent=146 // pred_check_branch
          %372 = sbr.rel (%p370) target = $region159
        $region158: #{lora_mha_forward.4} parent=146 // pred_region
          _
        $region159: #{lora_mha_forward.4} parent=146 // pred_fallthru
          _
        %s373 = sand.u32 %s37, 1
        %s374 = sand.u32 %s37, 1
        %s375 = smul.addr %s374, 8
        %s376 = scalar_lea.vmem [#allocation2], %s375
        %p377 = pneg %p50
        %p378 = pneg %p47
        %s379 = sand.u32 %s63, 1
        %s380 = sand.u32 %s63, 1
        %s381 = smul.addr %s380, 8
        %s382 = scalar_lea.vmem [#allocation3], %s381
        %p383 = pneg %p76
        %p384 = pneg %p73
        %s385 = sand.u32 %s89, 1
        %s386 = sand.u32 %s89, 1
        %s387 = smul.addr %s386, 8
        %s388 = scalar_lea.vmem [#allocation4], %s387
        %p389 = pneg %p102
        %p390 = pneg %p99
        %p391 = scmp.lt.s32.totalorder %s19, 1
        %s392 = scalar_select %p391, %s19, 1
        %s393 = scalar_lea.vmem %s3, %s392
        %p394 = pneg %p128
        %p395 = pneg %p125
        %p396 = pneg %p156
        %p397 = pneg %p153
        %s398 = smul.u32 2, %s20
        %p399 = scmp.lt.s32.totalorder %s19, 1
        %s400 = scalar_select %p399, %s19, 1
        %p401 = scmp.lt.s32.totalorder %s398, 1
        %s402 = scalar_select %p401, %s398, 1
        %s403 = smul.addr %s400, 2
        %s404 = sadd.s32 %s402, %s403
        %s405 = smul.addr %s404, 4
        %s406 = scalar_lea.vmem %s4, %s405
        %s407 = smul.u32 2, %s20
        %p408 = scmp.lt.s32.totalorder %s19, 1
        %s409 = scalar_select %p408, %s19, 1
        %s410 = scalar_lea.vmem %s3, %s409
        %s411 = smul.u32 2, %s20
        %p412 = scmp.lt.s32.totalorder %s19, 1
        %s413 = scalar_select %p412, %s19, 1
        %p414 = scmp.lt.s32.totalorder %s411, 1
        %s415 = scalar_select %p414, %s411, 1
        %s416 = smul.addr %s413, 2
        %s417 = sadd.s32 %s415, %s416
        %s418 = smul.addr %s417, 4
        %s419 = scalar_lea.vmem %s4, %s418
        %s420 = smul.u32 2, %s20
        %v422 = vld [vmem:[%s355] sm:$0xf]
        %v423 = vld [vmem:[%s355 + $0x4] sm:$0xf]
        %v424 = vunpack.c.l.bf16 %v422
        %v425 = vunpack.c.l.bf16 %v423
        %v426 = vmul.f32 %v424, 0.17677669
        %v427 = vmul.f32 %v425, 0.17677669
        %v428 = vpack.c.bf16 %v427, %v426
        %v429 = vld [vmem:[%s362] sm:$0xf]
        %v430 = vld [vmem:[%s362 + $0x4] sm:$0xf]
        %v431 = vld [vmem:[%s369] sm:$0xf]
        %v432 = vld [vmem:[%s369 + $0x4] sm:$0xf]
        %v433 = vld [vmem:[%s410] sm:$0x1]
        %v435 = vlaneseq
        %v436 = vshrl.u32 %v435, 7
        %v437 = vsub.s32 0, %v436
        %v438 = vrot.slane %v433, %v437
        %v442 = vunpack.c.l.b16 %v429
        %v443 = vunpack.c.l.b16 %v430
        %v444 = vpack.c.b16 %v443, %v442
        %vm445 = vcmask 261120
        %v447 = vsel %vm445, %v428, 0
        %v450 = vsel %vm445, %v444, 0
        %452 = vmatprep.subr.bf16.mxu0 0
        %453 = vmatpush1.bf16.xpose.msra.mxu0 %v450
        %454 = vmatprep.subr.bf16.mxu0 0
        %455 = vmatpush1.bf16.xpose.msra.mxu0 0
        %456 = vmatprep.subr.bf16.mxu0 0
        %457 = vmatpush1.bf16.xpose.msra.mxu0 0
        %458 = vmatprep.subr.bf16.mxu0 0
        %459 = vmatpush1.bf16.xpose.msra.mxu0 0
        %460 = vmatprep.subr.bf16.mxu0 0
        %461 = vmatpush1.bf16.xpose.msra.mxu0 0
        %462 = vmatprep.subr.bf16.mxu0 0
        %463 = vmatpush1.bf16.xpose.msra.mxu0 0
        %464 = vmatprep.subr.bf16.mxu0 0
        %465 = vmatpush1.bf16.xpose.msra.mxu0 0
        %466 = vmatprep.subr.bf16.mxu0 0
        %467 = vmatpush1.bf16.xpose.msra.mxu0 0
        %468 = vmatprep.subr.bf16.mxu0 0
        %469 = vmatpush1.bf16.xpose.msra.mxu0 0
        %470 = vmatprep.subr.bf16.mxu0 0
        %471 = vmatpush1.bf16.xpose.msra.mxu0 0
        %472 = vmatprep.subr.bf16.mxu0 0
        %473 = vmatpush1.bf16.xpose.msra.mxu0 0
        %474 = vmatprep.subr.bf16.mxu0 0
        %475 = vmatpush1.bf16.xpose.msra.mxu0 0
        %476 = vmatprep.subr.bf16.mxu0 0
        %477 = vmatpush1.bf16.xpose.msra.mxu0 0
        %478 = vmatprep.subr.bf16.mxu0 0
        %479 = vmatpush1.bf16.xpose.msra.mxu0 0
        %480 = vmatprep.subr.bf16.mxu0 0
        %481 = vmatpush1.bf16.xpose.msra.mxu0 0
        %482 = vmatprep.subr.bf16.mxu0 0
        %483 = vmatpush1.bf16.xpose.msra.mxu0 0
        %484 = vmatprep.mubr.bf16.mxu0 0
        %485 = vmatmul.mubr.bf16.gmra.mrb[0].mxu0 %v447
        %v486 = vpop.f32.mrb[0].mxu0
        %v487 = vadd.f32 %v438, %v486
        %v488 = vpop.f32.mrb[0].mxu0
        %v489 = vpop.f32.mrb[0].mxu0
        %v490 = vadd.f32 %v438, %v489
        %v491 = vpop.f32.mrb[0].mxu0
        %492 = vdwg.mxu0
        %vm493 = vcmask 130048
        %v494 = vsel %vm493, %v487, -inf
        %495 = vmax.xlane.f32.xlu0 %v494
        %v496 = vpop.xlane.xlu0 %495
        %v497 = vsel %vm493, %v490, -inf
        %498 = vmax.xlane.f32.xlu0 %v497
        %v499 = vpop.xlane.xlu0 %498
        %v500 = vsub.f32 %v487, %v496
        %v501 = vsub.f32 %v490, %v499
        %v502 = vmul.f32 %v500, 1.442695
        %v503 = vpow.pop %v502
        %v504 = vmul.f32 %v501, 1.442695
        %v505 = vpow.pop %v504
        %v506 = vsel %vm493, %v503, 0.0
        %507 = vadd.xlane.f32.xlu0 %v506
        %v508 = vpop.xlane.xlu0 %507
        %v509 = vsel %vm493, %v505, 0.0
        %510 = vadd.xlane.f32.xlu0 %v509
        %v511 = vpop.xlane.xlu0 %510
        %v512 = vrcp.pop %v508
        %v513 = vrcp.pop %v511
        %v514 = vmul.f32 %v503, %v512
        %v515 = vmul.f32 %v505, %v513
        %v516 = vpack.c.bf16 %v515, %v514
        %v519 = vunpack.c.l.b16 %v431
        %v520 = vunpack.c.l.b16 %v432
        %v521 = vpack.c.b16 %v520, %v519
        %v524 = vsel %vm493, %v516, 0
        %526 = vmatprep.subr.bf16.mxu0 0
        %527 = vmatpush1.bf16.msra.mxu0 %v521
        %528 = vmatprep.subr.bf16.mxu0 0
        %529 = vmatpush1.bf16.msra.mxu0 0
        %530 = vmatprep.subr.bf16.mxu0 0
        %531 = vmatpush1.bf16.msra.mxu0 0
        %532 = vmatprep.subr.bf16.mxu0 0
        %533 = vmatpush1.bf16.msra.mxu0 0
        %534 = vmatprep.subr.bf16.mxu0 0
        %535 = vmatpush1.bf16.msra.mxu0 0
        %536 = vmatprep.subr.bf16.mxu0 0
        %537 = vmatpush1.bf16.msra.mxu0 0
        %538 = vmatprep.subr.bf16.mxu0 0
        %539 = vmatpush1.bf16.msra.mxu0 0
        %540 = vmatprep.subr.bf16.mxu0 0
        %541 = vmatpush1.bf16.msra.mxu0 0
        %542 = vmatprep.subr.bf16.mxu0 0
        %543 = vmatpush1.bf16.msra.mxu0 0
        %544 = vmatprep.subr.bf16.mxu0 0
        %545 = vmatpush1.bf16.msra.mxu0 0
        %546 = vmatprep.subr.bf16.mxu0 0
        %547 = vmatpush1.bf16.msra.mxu0 0
        %548 = vmatprep.subr.bf16.mxu0 0
        %549 = vmatpush1.bf16.msra.mxu0 0
        %550 = vmatprep.subr.bf16.mxu0 0
        %551 = vmatpush1.bf16.msra.mxu0 0
        %552 = vmatprep.subr.bf16.mxu0 0
        %553 = vmatpush1.bf16.msra.mxu0 0
        %554 = vmatprep.subr.bf16.mxu0 0
        %555 = vmatpush1.bf16.msra.mxu0 0
        %556 = vmatprep.subr.bf16.mxu0 0
        %557 = vmatpush1.bf16.msra.mxu0 0
        %558 = vmatprep.mubr.bf16.mxu0 0
        %559 = vmatmul.mubr.bf16.gmra.mrb[0].mxu0 %v524
        %v560 = vpop.f32.mrb[0].mxu0
        %v561 = vadd.f32 0.0, %v560
        %v562 = vpop.f32.mrb[0].mxu0
        %v563 = vpop.f32.mrb[0].mxu0
        %v564 = vadd.f32 0.0, %v563
        %v565 = vpop.f32.mrb[0].mxu0
        %566 = vdwg.mxu0
        %568 = vrot.lane.b32.xlu0 %v428, 96
        %v569 = vpop.permute.xlu0 %568
        %570 = vrot.lane.b32.xlu0 %v444, 96
        %v571 = vpop.permute.xlu0 %570
        %v573 = vsel %vm445, %v569, 0
        %v576 = vsel %vm445, %v571, 0
        %578 = vmatprep.subr.bf16.mxu0 0
        %579 = vmatpush1.bf16.xpose.msra.mxu0 %v576
        %580 = vmatprep.subr.bf16.mxu0 0
        %581 = vmatpush1.bf16.xpose.msra.mxu0 0
        %582 = vmatprep.subr.bf16.mxu0 0
        %583 = vmatpush1.bf16.xpose.msra.mxu0 0
        %584 = vmatprep.subr.bf16.mxu0 0
        %585 = vmatpush1.bf16.xpose.msra.mxu0 0
        %586 = vmatprep.subr.bf16.mxu0 0
        %587 = vmatpush1.bf16.xpose.msra.mxu0 0
        %588 = vmatprep.subr.bf16.mxu0 0
        %589 = vmatpush1.bf16.xpose.msra.mxu0 0
        %590 = vmatprep.subr.bf16.mxu0 0
        %591 = vmatpush1.bf16.xpose.msra.mxu0 0
        %592 = vmatprep.subr.bf16.mxu0 0
        %593 = vmatpush1.bf16.xpose.msra.mxu0 0
        %594 = vmatprep.subr.bf16.mxu0 0
        %595 = vmatpush1.bf16.xpose.msra.mxu0 0
        %596 = vmatprep.subr.bf16.mxu0 0
        %597 = vmatpush1.bf16.xpose.msra.mxu0 0
        %598 = vmatprep.subr.bf16.mxu0 0
        %599 = vmatpush1.bf16.xpose.msra.mxu0 0
        %600 = vmatprep.subr.bf16.mxu0 0
        %601 = vmatpush1.bf16.xpose.msra.mxu0 0
        %602 = vmatprep.subr.bf16.mxu0 0
        %603 = vmatpush1.bf16.xpose.msra.mxu0 0
        %604 = vmatprep.subr.bf16.mxu0 0
        %605 = vmatpush1.bf16.xpose.msra.mxu0 0
        %606 = vmatprep.subr.bf16.mxu0 0
        %607 = vmatpush1.bf16.xpose.msra.mxu0 0
        %608 = vmatprep.subr.bf16.mxu0 0
        %609 = vmatpush1.bf16.xpose.msra.mxu0 0
        %610 = vmatprep.mubr.bf16.mxu0 0
        %611 = vmatmul.mubr.bf16.gmra.mrb[0].mxu0 %v573
        %v612 = vpop.f32.mrb[0].mxu0
        %v613 = vadd.f32 %v438, %v612
        %v614 = vpop.f32.mrb[0].mxu0
        %v615 = vpop.f32.mrb[0].mxu0
        %v616 = vadd.f32 %v438, %v615
        %v617 = vpop.f32.mrb[0].mxu0
        %618 = vdwg.mxu0
        %v619 = vsel %vm493, %v613, -inf
        %620 = vmax.xlane.f32.xlu0 %v619
        %v621 = vpop.xlane.xlu0 %620
        %v622 = vsel %vm493, %v616, -inf
        %623 = vmax.xlane.f32.xlu0 %v622
        %v624 = vpop.xlane.xlu0 %623
        %v625 = vsub.f32 %v613, %v621
        %v626 = vsub.f32 %v616, %v624
        %v627 = vmul.f32 %v625, 1.442695
        %v628 = vpow.pop %v627
        %v629 = vmul.f32 %v626, 1.442695
        %v630 = vpow.pop %v629
        %v631 = vsel %vm493, %v628, 0.0
        %632 = vadd.xlane.f32.xlu0 %v631
        %v633 = vpop.xlane.xlu0 %632
        %v634 = vsel %vm493, %v630, 0.0
        %635 = vadd.xlane.f32.xlu0 %v634
        %v636 = vpop.xlane.xlu0 %635
        %v637 = vrcp.pop %v633
        %v638 = vrcp.pop %v636
        %v639 = vmul.f32 %v628, %v637
        %v640 = vmul.f32 %v630, %v638
        %v641 = vpack.c.bf16 %v640, %v639
        %642 = vrot.lane.b32.xlu0 %v521, 96
        %v643 = vpop.permute.xlu0 %642
        %v646 = vsel %vm493, %v641, 0
        %648 = vmatprep.subr.bf16.mxu0 0
        %649 = vmatpush1.bf16.msra.mxu0 %v643
        %650 = vmatprep.subr.bf16.mxu0 0
        %651 = vmatpush1.bf16.msra.mxu0 0
        %652 = vmatprep.subr.bf16.mxu0 0
        %653 = vmatpush1.bf16.msra.mxu0 0
        %654 = vmatprep.subr.bf16.mxu0 0
        %655 = vmatpush1.bf16.msra.mxu0 0
        %656 = vmatprep.subr.bf16.mxu0 0
        %657 = vmatpush1.bf16.msra.mxu0 0
        %658 = vmatprep.subr.bf16.mxu0 0
        %659 = vmatpush1.bf16.msra.mxu0 0
        %660 = vmatprep.subr.bf16.mxu0 0
        %661 = vmatpush1.bf16.msra.mxu0 0
        %662 = vmatprep.subr.bf16.mxu0 0
        %663 = vmatpush1.bf16.msra.mxu0 0
        %664 = vmatprep.subr.bf16.mxu0 0
        %665 = vmatpush1.bf16.msra.mxu0 0
        %666 = vmatprep.subr.bf16.mxu0 0
        %667 = vmatpush1.bf16.msra.mxu0 0
        %668 = vmatprep.subr.bf16.mxu0 0
        %669 = vmatpush1.bf16.msra.mxu0 0
        %670 = vmatprep.subr.bf16.mxu0 0
        %671 = vmatpush1.bf16.msra.mxu0 0
        %672 = vmatprep.subr.bf16.mxu0 0
        %673 = vmatpush1.bf16.msra.mxu0 0
        %674 = vmatprep.subr.bf16.mxu0 0
        %675 = vmatpush1.bf16.msra.mxu0 0
        %676 = vmatprep.subr.bf16.mxu0 0
        %677 = vmatpush1.bf16.msra.mxu0 0
        %678 = vmatprep.subr.bf16.mxu0 0
        %679 = vmatpush1.bf16.msra.mxu0 0
        %680 = vmatprep.mubr.bf16.mxu0 0
        %681 = vmatmul.mubr.bf16.gmra.mrb[0].mxu0 %v646
        %v682 = vpop.f32.mrb[0].mxu0
        %v683 = vadd.f32 0.0, %v682
        %v684 = vpop.f32.mrb[0].mxu0
        %v685 = vpop.f32.mrb[0].mxu0
        %v686 = vadd.f32 0.0, %v685
        %v687 = vpop.f32.mrb[0].mxu0
        %688 = vdwg.mxu0
        %689 = vrot.lane.b32.xlu0 %v428, 64
        %v690 = vpop.permute.xlu0 %689
        %691 = vrot.lane.b32.xlu0 %v444, 64
        %v692 = vpop.permute.xlu0 %691
        %v694 = vsel %vm445, %v690, 0
        %v697 = vsel %vm445, %v692, 0
        %699 = vmatprep.subr.bf16.mxu0 0
        %700 = vmatpush1.bf16.xpose.msra.mxu0 %v697
        %701 = vmatprep.subr.bf16.mxu0 0
        %702 = vmatpush1.bf16.xpose.msra.mxu0 0
        %703 = vmatprep.subr.bf16.mxu0 0
        %704 = vmatpush1.bf16.xpose.msra.mxu0 0
        %705 = vmatprep.subr.bf16.mxu0 0
        %706 = vmatpush1.bf16.xpose.msra.mxu0 0
        %707 = vmatprep.subr.bf16.mxu0 0
        %708 = vmatpush1.bf16.xpose.msra.mxu0 0
        %709 = vmatprep.subr.bf16.mxu0 0
        %710 = vmatpush1.bf16.xpose.msra.mxu0 0
        %711 = vmatprep.subr.bf16.mxu0 0
        %712 = vmatpush1.bf16.xpose.msra.mxu0 0
        %713 = vmatprep.subr.bf16.mxu0 0
        %714 = vmatpush1.bf16.xpose.msra.mxu0 0
        %715 = vmatprep.subr.bf16.mxu0 0
        %716 = vmatpush1.bf16.xpose.msra.mxu0 0
        %717 = vmatprep.subr.bf16.mxu0 0
        %718 = vmatpush1.bf16.xpose.msra.mxu0 0
        %719 = vmatprep.subr.bf16.mxu0 0
        %720 = vmatpush1.bf16.xpose.msra.mxu0 0
        %721 = vmatprep.subr.bf16.mxu0 0
        %722 = vmatpush1.bf16.xpose.msra.mxu0 0
        %723 = vmatprep.subr.bf16.mxu0 0
        %724 = vmatpush1.bf16.xpose.msra.mxu0 0
        %725 = vmatprep.subr.bf16.mxu0 0
        %726 = vmatpush1.bf16.xpose.msra.mxu0 0
        %727 = vmatprep.subr.bf16.mxu0 0
        %728 = vmatpush1.bf16.xpose.msra.mxu0 0
        %729 = vmatprep.subr.bf16.mxu0 0
        %730 = vmatpush1.bf16.xpose.msra.mxu0 0
        %731 = vmatprep.mubr.bf16.mxu0 0
        %732 = vmatmul.mubr.bf16.gmra.mrb[0].mxu0 %v694
        %v733 = vpop.f32.mrb[0].mxu0
        %v734 = vadd.f32 %v438, %v733
        %v735 = vpop.f32.mrb[0].mxu0
        %v736 = vpop.f32.mrb[0].mxu0
        %v737 = vadd.f32 %v438, %v736
        %v738 = vpop.f32.mrb[0].mxu0
        %739 = vdwg.mxu0
        %v740 = vsel %vm493, %v734, -inf
        %741 = vmax.xlane.f32.xlu0 %v740
        %v742 = vpop.xlane.xlu0 %741
        %v743 = vsel %vm493, %v737, -inf
        %744 = vmax.xlane.f32.xlu0 %v743
        %v745 = vpop.xlane.xlu0 %744
        %v746 = vsub.f32 %v734, %v742
        %v747 = vsub.f32 %v737, %v745
        %v748 = vmul.f32 %v746, 1.442695
        %v749 = vpow.pop %v748
        %v750 = vmul.f32 %v747, 1.442695
        %v751 = vpow.pop %v750
        %v752 = vsel %vm493, %v749, 0.0
        %753 = vadd.xlane.f32.xlu0 %v752
        %v754 = vpop.xlane.xlu0 %753
        %v755 = vsel %vm493, %v751, 0.0
        %756 = vadd.xlane.f32.xlu0 %v755
        %v757 = vpop.xlane.xlu0 %756
        %v758 = vrcp.pop %v754
        %v759 = vrcp.pop %v757
        %v760 = vmul.f32 %v749, %v758
        %v761 = vmul.f32 %v751, %v759
        %v762 = vpack.c.bf16 %v761, %v760
        %763 = vrot.lane.b32.xlu0 %v521, 64
        %v764 = vpop.permute.xlu0 %763
        %v767 = vsel %vm493, %v762, 0
        %769 = vmatprep.subr.bf16.mxu0 0
        %770 = vmatpush1.bf16.msra.mxu0 %v764
        %771 = vmatprep.subr.bf16.mxu0 0
        %772 = vmatpush1.bf16.msra.mxu0 0
        %773 = vmatprep.subr.bf16.mxu0 0
        %774 = vmatpush1.bf16.msra.mxu0 0
        %775 = vmatprep.subr.bf16.mxu0 0
        %776 = vmatpush1.bf16.msra.mxu0 0
        %777 = vmatprep.subr.bf16.mxu0 0
        %778 = vmatpush1.bf16.msra.mxu0 0
        %779 = vmatprep.subr.bf16.mxu0 0
        %780 = vmatpush1.bf16.msra.mxu0 0
        %781 = vmatprep.subr.bf16.mxu0 0
        %782 = vmatpush1.bf16.msra.mxu0 0
        %783 = vmatprep.subr.bf16.mxu0 0
        %784 = vmatpush1.bf16.msra.mxu0 0
        %785 = vmatprep.subr.bf16.mxu0 0
        %786 = vmatpush1.bf16.msra.mxu0 0
        %787 = vmatprep.subr.bf16.mxu0 0
        %788 = vmatpush1.bf16.msra.mxu0 0
        %789 = vmatprep.subr.bf16.mxu0 0
        %790 = vmatpush1.bf16.msra.mxu0 0
        %791 = vmatprep.subr.bf16.mxu0 0
        %792 = vmatpush1.bf16.msra.mxu0 0
        %793 = vmatprep.subr.bf16.mxu0 0
        %794 = vmatpush1.bf16.msra.mxu0 0
        %795 = vmatprep.subr.bf16.mxu0 0
        %796 = vmatpush1.bf16.msra.mxu0 0
        %797 = vmatprep.subr.bf16.mxu0 0
        %798 = vmatpush1.bf16.msra.mxu0 0
        %799 = vmatprep.subr.bf16.mxu0 0
        %800 = vmatpush1.bf16.msra.mxu0 0
        %801 = vmatprep.mubr.bf16.mxu0 0
        %802 = vmatmul.mubr.bf16.gmra.mrb[0].mxu0 %v767
        %v803 = vpop.f32.mrb[0].mxu0
        %v804 = vadd.f32 0.0, %v803
        %v805 = vpop.f32.mrb[0].mxu0
        %v806 = vpop.f32.mrb[0].mxu0
        %v807 = vadd.f32 0.0, %v806
        %v808 = vpop.f32.mrb[0].mxu0
        %809 = vdwg.mxu0
        %810 = vrot.lane.b32.xlu0 %v428, 32
        %v811 = vpop.permute.xlu0 %810
        %812 = vrot.lane.b32.xlu0 %v444, 32
        %v813 = vpop.permute.xlu0 %812
        %v815 = vsel %vm445, %v811, 0
        %v818 = vsel %vm445, %v813, 0
        %820 = vmatprep.subr.bf16.mxu0 0
        %821 = vmatpush1.bf16.xpose.msra.mxu0 %v818
        %822 = vmatprep.subr.bf16.mxu0 0
        %823 = vmatpush1.bf16.xpose.msra.mxu0 0
        %824 = vmatprep.subr.bf16.mxu0 0
        %825 = vmatpush1.bf16.xpose.msra.mxu0 0
        %826 = vmatprep.subr.bf16.mxu0 0
        %827 = vmatpush1.bf16.xpose.msra.mxu0 0
        %828 = vmatprep.subr.bf16.mxu0 0
        %829 = vmatpush1.bf16.xpose.msra.mxu0 0
        %830 = vmatprep.subr.bf16.mxu0 0
        %831 = vmatpush1.bf16.xpose.msra.mxu0 0
        %832 = vmatprep.subr.bf16.mxu0 0
        %833 = vmatpush1.bf16.xpose.msra.mxu0 0
        %834 = vmatprep.subr.bf16.mxu0 0
        %835 = vmatpush1.bf16.xpose.msra.mxu0 0
        %836 = vmatprep.subr.bf16.mxu0 0
        %837 = vmatpush1.bf16.xpose.msra.mxu0 0
        %838 = vmatprep.subr.bf16.mxu0 0
        %839 = vmatpush1.bf16.xpose.msra.mxu0 0
        %840 = vmatprep.subr.bf16.mxu0 0
        %841 = vmatpush1.bf16.xpose.msra.mxu0 0
        %842 = vmatprep.subr.bf16.mxu0 0
        %843 = vmatpush1.bf16.xpose.msra.mxu0 0
        %844 = vmatprep.subr.bf16.mxu0 0
        %845 = vmatpush1.bf16.xpose.msra.mxu0 0
        %846 = vmatprep.subr.bf16.mxu0 0
        %847 = vmatpush1.bf16.xpose.msra.mxu0 0
        %848 = vmatprep.subr.bf16.mxu0 0
        %849 = vmatpush1.bf16.xpose.msra.mxu0 0
        %850 = vmatprep.subr.bf16.mxu0 0
        %851 = vmatpush1.bf16.xpose.msra.mxu0 0
        %852 = vmatprep.mubr.bf16.mxu0 0
        %853 = vmatmul.mubr.bf16.gmra.mrb[0].mxu0 %v815
        %v854 = vpop.f32.mrb[0].mxu0
        %v855 = vadd.f32 %v438, %v854
        %v856 = vpop.f32.mrb[0].mxu0
        %v857 = vpop.f32.mrb[0].mxu0
        %v858 = vadd.f32 %v438, %v857
        %v859 = vpop.f32.mrb[0].mxu0
        %860 = vdwg.mxu0
        %v861 = vsel %vm493, %v855, -inf
        %862 = vmax.xlane.f32.xlu0 %v861
        %v863 = vpop.xlane.xlu0 %862
        %v864 = vsel %vm493, %v858, -inf
        %865 = vmax.xlane.f32.xlu0 %v864
        %v866 = vpop.xlane.xlu0 %865
        %v867 = vsub.f32 %v855, %v863
        %v868 = vsub.f32 %v858, %v866
        %v869 = vmul.f32 %v867, 1.442695
        %v870 = vpow.pop %v869
        %v871 = vmul.f32 %v868, 1.442695
        %v872 = vpow.pop %v871
        %v873 = vsel %vm493, %v870, 0.0
        %874 = vadd.xlane.f32.xlu0 %v873
        %v875 = vpop.xlane.xlu0 %874
        %v876 = vsel %vm493, %v872, 0.0
        %877 = vadd.xlane.f32.xlu0 %v876
        %v878 = vpop.xlane.xlu0 %877
        %v879 = vrcp.pop %v875
        %v880 = vrcp.pop %v878
        %v881 = vmul.f32 %v870, %v879
        %v882 = vmul.f32 %v872, %v880
        %v883 = vpack.c.bf16 %v882, %v881
        %884 = vrot.lane.b32.xlu0 %v521, 32
        %v885 = vpop.permute.xlu0 %884
        %v888 = vsel %vm493, %v883, 0
        %890 = vmatprep.subr.bf16.mxu0 0
        %891 = vmatpush1.bf16.msra.mxu0 %v885
        %892 = vmatprep.subr.bf16.mxu0 0
        %893 = vmatpush1.bf16.msra.mxu0 0
        %894 = vmatprep.subr.bf16.mxu0 0
        %895 = vmatpush1.bf16.msra.mxu0 0
        %896 = vmatprep.subr.bf16.mxu0 0
        %897 = vmatpush1.bf16.msra.mxu0 0
        %898 = vmatprep.subr.bf16.mxu0 0
        %899 = vmatpush1.bf16.msra.mxu0 0
        %900 = vmatprep.subr.bf16.mxu0 0
        %901 = vmatpush1.bf16.msra.mxu0 0
        %902 = vmatprep.subr.bf16.mxu0 0
        %903 = vmatpush1.bf16.msra.mxu0 0
        %904 = vmatprep.subr.bf16.mxu0 0
        %905 = vmatpush1.bf16.msra.mxu0 0
        %906 = vmatprep.subr.bf16.mxu0 0
        %907 = vmatpush1.bf16.msra.mxu0 0
        %908 = vmatprep.subr.bf16.mxu0 0
        %909 = vmatpush1.bf16.msra.mxu0 0
        %910 = vmatprep.subr.bf16.mxu0 0
        %911 = vmatpush1.bf16.msra.mxu0 0
        %912 = vmatprep.subr.bf16.mxu0 0
        %913 = vmatpush1.bf16.msra.mxu0 0
        %914 = vmatprep.subr.bf16.mxu0 0
        %915 = vmatpush1.bf16.msra.mxu0 0
        %916 = vmatprep.subr.bf16.mxu0 0
        %917 = vmatpush1.bf16.msra.mxu0 0
        %918 = vmatprep.subr.bf16.mxu0 0
        %919 = vmatpush1.bf16.msra.mxu0 0
        %920 = vmatprep.subr.bf16.mxu0 0
        %921 = vmatpush1.bf16.msra.mxu0 0
        %922 = vmatprep.mubr.bf16.mxu0 0
        %923 = vmatmul.mubr.bf16.gmra.mrb[0].mxu0 %v888
        %v924 = vpop.f32.mrb[0].mxu0
        %v925 = vadd.f32 0.0, %v924
        %v926 = vpop.f32.mrb[0].mxu0
        %v927 = vpop.f32.mrb[0].mxu0
        %v928 = vadd.f32 0.0, %v927
        %v929 = vpop.f32.mrb[0].mxu0
        %930 = vdwg.mxu0
        %933 = vrot.lane.b32.xlu0 %v683, 32
        %v934 = vpop.permute.xlu0 %933
        %935 = vrot.lane.b32.xlu0 %v686, 32
        %v936 = vpop.permute.xlu0 %935
        %941 = vrot.lane.b32.xlu0 %v804, 64
        %v942 = vpop.permute.xlu0 %941
        %943 = vrot.lane.b32.xlu0 %v807, 64
        %v944 = vpop.permute.xlu0 %943
        %949 = vrot.lane.b32.xlu0 %v925, 96
        %v950 = vpop.permute.xlu0 %949
        %951 = vrot.lane.b32.xlu0 %v928, 96
        %v952 = vpop.permute.xlu0 %951
        %v955 = vsel %vm445, %v561, %v934
        %v956 = vsel %vm445, %v564, %v936
        %vm957 = vcmask 523264
        %v958 = vsel %vm957, %v955, %v942
        %v959 = vsel %vm957, %v956, %v944
        %vm960 = vcmask 785408
        %v961 = vsel %vm960, %v958, %v950
        %v962 = vsel %vm960, %v959, %v952
        %v963 = vpack.c.bf16 %v962, %v961
        %v965 = vunpack.c.l.b16 %v963
        %v966 = vunpack.c.h.b16 %v963
        %v967 = vpack.c.b16 %v965, %v965
        %v968 = vpack.c.b16 %v966, %v966
        %971 = vst [vmem:[%s419] sm:$0xf] %v967
        %972 = vst [vmem:[%s419 + $0x4] sm:$0xf] %v968
        %s973 = smul.u32 2, %s20
        %p974 = scmp.lt.s32.totalorder %s19, 1
        %s975 = scalar_select %p974, %s19, 1
        %p976 = scmp.lt.s32.totalorder %s973, 1
        %s977 = scalar_select %p976, %s973, 1
        %s978 = smul.addr %s975, 2
        %s979 = sadd.s32 %s977, %s978
        %s980 = smul.addr %s979, 4
        %s981 = scalar_lea.vmem %s4, %s980
        // Predicated region
        $region160: #{lora_mha_forward.4} parent=146 // pred_check
          %p982 = pneg %p153
        $region161: #{lora_mha_forward.4} parent=146 // pred_check_branch
          %984 = sbr.rel (%p982) target = $region163
        $region162: #{lora_mha_forward.4} parent=146 // pred_region
          %s985 = smul.u32 2, %s20
        $region163: #{lora_mha_forward.4} parent=146 // pred_fallthru
          _
      $region147: #{lora_mha_forward.4} parent=5 // pred_fallthru
        _
      %p986 = scmp.le.s32.totalorder 2, %s10
      // Predicated region
      $region164: #{lora_mha_forward.4} parent=5 // pred_check
        %p987 = pneg %p986
      $region165: #{lora_mha_forward.4} parent=5 // pred_check_branch
        %989 = sbr.rel (%p987) target = $region167
      $region166: #{lora_mha_forward.4} parent=5 // pred_region
        %s990 = ssub.s32 %s10, 2
        // Predicated region
        $region168: #{lora_mha_forward.4} parent=166 // pred_check
          %p991 = pneg %p159
        $region169: #{lora_mha_forward.4} parent=166 // pred_check_branch
          %993 = sbr.rel (%p991) target = $region171
        $region170: #{lora_mha_forward.4} parent=166 // pred_region
          %s994 = smul.u32 2, %s22
          %p995 = scmp.lt.s32.totalorder %s21, 1
          %s996 = scalar_select %p995, %s21, 1
          %p997 = scmp.lt.s32.totalorder %s994, 1
          %s998 = scalar_select %p997, %s994, 1
          %s999 = smul.addr %s996, 2
          %s1000 = sadd.s32 %s998, %s999
          %s1001 = smul.addr %s1000, 4
          %s1002 = scalar_lea.vmem %s4, %s1001
        $region171: #{lora_mha_forward.4} parent=166 // pred_fallthru
          _
      $region167: #{lora_mha_forward.4} parent=5 // pred_fallthru
        _
    $region6: #{lora_mha_forward.4} parent=1 // loop_footer
      %s14 = sadd.s32 1, %s10
    $region7: #{lora_mha_forward.4} parent=1 // loop_footer_branch
      %9 = sbr.rel target = $region3
    $region8: #{lora_mha_forward.4} parent=1 // loop_exit
      _

// kernel: lora_mha_forward.5
$region0: #{lora_mha_forward.5}
  #allocation0 [shape = 'u32[]', space=smem, size = 0x4, offset = 0x4, fixed_abs, tag = 'smem constant byte address 0x4 - core index']
  #allocation1 [shape = 'u32[144,128]{1,0:T(1,128)}', space=vmem, size = 0x12000, scoped, tag = 'internal scratch']
  %s0 = inlined_call_operand.vmem [shape: bf16[32,128], index: 0, kind: input, shape index: {}]
  %s1 = inlined_call_operand.vmem [shape: bf16[128,128], index: 1, kind: input, shape index: {}]
  %s2 = inlined_call_operand.vmem [shape: f32[1,128], index: 2, kind: input, shape index: {}]
  %s3 = inlined_call_operand.hbm [shape: f32[32,128], index: 3, kind: output, shape index: {}]
  %s4 = sld [smem:[#allocation0]]
  $region22: #{lora_mha_forward.5} parent=0
    _
  %s6 = ssub.s32 1, %s4
  %s7 = scalar_select 0, %s6, %s4
  $region1: #{lora_mha_forward.5} parent=0
    #allocation2 [shape = 'u8[16384]{0}', space=vmem, size = 0x4000, scoped, tag = 'output window, operand 0, single buffered']
    #allocation3 [shape = 's32[1]{0}', space=sflag, size = 0x4, scoped, tag = 'scoped memory for lora_mha_forward.5']
    %8 = vsyncpa [#allocation3], 0
    // Predicated region
    $region2: #{lora_mha_forward.5} parent=1 // pred_check
      _
    $region3: #{lora_mha_forward.5} parent=1 // pred_check_branch
      %10 = sbr.rel (0) target = $region5
    $region4: #{lora_mha_forward.5} parent=1 // pred_region
      _
    $region5: #{lora_mha_forward.5} parent=1 // pred_fallthru
      _
    // Predicated region
    $region6: #{lora_mha_forward.5} parent=1 // pred_check
      _
    $region7: #{lora_mha_forward.5} parent=1 // pred_check_branch
      %12 = sbr.rel (0) target = $region9
    $region8: #{lora_mha_forward.5} parent=1 // pred_region
      _
    $region9: #{lora_mha_forward.5} parent=1 // pred_fallthru
      _
    // Predicated region
    $region10: #{lora_mha_forward.5} parent=1 // pred_check
      _
    $region11: #{lora_mha_forward.5} parent=1 // pred_check_branch
      %14 = sbr.rel (0) target = $region13
    $region12: #{lora_mha_forward.5} parent=1 // pred_region
      _
    $region13: #{lora_mha_forward.5} parent=1 // pred_fallthru
      _
    %v16 = vld [vmem:[%s0] sm:$0xf]
    %v17 = vld [vmem:[%s0 + $0x4] sm:$0xf]
    %v18 = vld [vmem:[%s0 + $0x8] sm:$0xf]
    %v19 = vld [vmem:[%s0 + $0xc] sm:$0xf]
    %v20 = vld [vmem:[%s1] sm:$0xf]
    %v21 = vld [vmem:[%s1 + $0x4] sm:$0xf]
    %v22 = vld [vmem:[%s1 + $0x8] sm:$0xf]
    %v23 = vld [vmem:[%s1 + $0xc] sm:$0xf]
    %v24 = vld [vmem:[%s1 + $0x10] sm:$0xf]
    %v25 = vld [vmem:[%s1 + $0x14] sm:$0xf]
    %v26 = vld [vmem:[%s1 + $0x18] sm:$0xf]
    %v27 = vld [vmem:[%s1 + $0x1c] sm:$0xf]
    %v28 = vld [vmem:[%s1 + $0x20] sm:$0xf]
    %v29 = vld [vmem:[%s1 + $0x24] sm:$0xf]
    %v30 = vld [vmem:[%s1 + $0x28] sm:$0xf]
    %v31 = vld [vmem:[%s1 + $0x2c] sm:$0xf]
    %v32 = vld [vmem:[%s1 + $0x30] sm:$0xf]
    %v33 = vld [vmem:[%s1 + $0x34] sm:$0xf]
    %v34 = vld [vmem:[%s1 + $0x38] sm:$0xf]
    %v35 = vld [vmem:[%s1 + $0x3c] sm:$0xf]
    %v36 = vld [vmem:[%s2] sm:$0x1]
    %v38 = vlaneseq
    %v39 = vshrl.u32 %v38, 7
    %v40 = vsub.s32 0, %v39
    %v41 = vrot.slane %v36, %v40
    %v47 = vunpack.c.l.b16 %v16
    %v48 = vunpack.c.l.b16 %v17
    %v49 = vunpack.c.l.b16 %v18
    %v50 = vunpack.c.l.b16 %v19
    %v51 = vpack.c.b16 %v48, %v47
    %v52 = vpack.c.b16 %v50, %v49
    %v71 = vunpack.c.l.b16 %v20
    %v72 = vunpack.c.l.b16 %v21
    %v73 = vunpack.c.l.b16 %v22
    %v74 = vunpack.c.l.b16 %v23
    %v75 = vunpack.c.l.b16 %v24
    %v76 = vunpack.c.l.b16 %v25
    %v77 = vunpack.c.l.b16 %v26
    %v78 = vunpack.c.l.b16 %v27
    %v79 = vunpack.c.l.b16 %v28
    %v80 = vunpack.c.l.b16 %v29
    %v81 = vunpack.c.l.b16 %v30
    %v82 = vunpack.c.l.b16 %v31
    %v83 = vunpack.c.l.b16 %v32
    %v84 = vunpack.c.l.b16 %v33
    %v85 = vunpack.c.l.b16 %v34
    %v86 = vunpack.c.l.b16 %v35
    %v87 = vpack.c.b16 %v72, %v71
    %v88 = vpack.c.b16 %v74, %v73
    %v89 = vpack.c.b16 %v76, %v75
    %v90 = vpack.c.b16 %v78, %v77
    %v91 = vpack.c.b16 %v80, %v79
    %v92 = vpack.c.b16 %v82, %v81
    %v93 = vpack.c.b16 %v84, %v83
    %v94 = vpack.c.b16 %v86, %v85
    %103 = vmatprep.subr.bf16.mxu0 0
    %104 = vmatpush1.bf16.msra.mxu0 %v87
    %105 = vmatprep.subr.bf16.mxu0 0
    %106 = vmatpush1.bf16.msra.mxu0 %v88
    %107 = vmatprep.subr.bf16.mxu0 0
    %108 = vmatpush1.bf16.msra.mxu0 %v89
    %109 = vmatprep.subr.bf16.mxu0 0
    %110 = vmatpush1.bf16.msra.mxu0 %v90
    %111 = vmatprep.subr.bf16.mxu0 0
    %112 = vmatpush1.bf16.msra.mxu0 %v91
    %113 = vmatprep.subr.bf16.mxu0 0
    %114 = vmatpush1.bf16.msra.mxu0 %v92
    %115 = vmatprep.subr.bf16.mxu0 0
    %116 = vmatpush1.bf16.msra.mxu0 %v93
    %117 = vmatprep.subr.bf16.mxu0 0
    %118 = vmatpush1.bf16.msra.mxu0 %v94
    %119 = vmatprep.subr.bf16.mxu0 0
    %120 = vmatpush1.bf16.msra.mxu0 0
    %121 = vmatprep.subr.bf16.mxu0 0
    %122 = vmatpush1.bf16.msra.mxu0 0
    %123 = vmatprep.subr.bf16.mxu0 0
    %124 = vmatpush1.bf16.msra.mxu0 0
    %125 = vmatprep.subr.bf16.mxu0 0
    %126 = vmatpush1.bf16.msra.mxu0 0
    %127 = vmatprep.subr.bf16.mxu0 0
    %128 = vmatpush1.bf16.msra.mxu0 0
    %129 = vmatprep.subr.bf16.mxu0 0
    %130 = vmatpush1.bf16.msra.mxu0 0
    %131 = vmatprep.subr.bf16.mxu0 0
    %132 = vmatpush1.bf16.msra.mxu0 0
    %133 = vmatprep.subr.bf16.mxu0 0
    %134 = vmatpush1.bf16.msra.mxu0 0
    %135 = vmatprep.mubr.bf16.mxu0 0
    %136 = vmatmul.mubr.bf16.gmra.mrb[0].mxu0 %v51
    %v137 = vpop.f32.mrb[0].mxu0
    %v138 = vadd.f32 %v41, %v137
    %v139 = vpop.f32.mrb[0].mxu0
    %v140 = vpop.f32.mrb[0].mxu0
    %v141 = vadd.f32 %v41, %v140
    %v142 = vpop.f32.mrb[0].mxu0
    %143 = vmatprep.mubr.bf16.mxu0 0
    %144 = vmatmul.mubr.bf16.gmra.mrb[0].mxu0 %v52
    %v145 = vpop.f32.mrb[0].mxu0
    %v146 = vadd.f32 %v41, %v145
    %v147 = vpop.f32.mrb[0].mxu0
    %v148 = vpop.f32.mrb[0].mxu0
    %v149 = vadd.f32 %v41, %v148
    %v150 = vpop.f32.mrb[0].mxu0
    %151 = vdwg.mxu0
    %152 = vst [vmem:[#allocation2] sm:$0xff] %v138
    %153 = vst [vmem:[#allocation2 + $0x8] sm:$0xff] %v141
    %154 = vst [vmem:[#allocation2 + $0x10] sm:$0xff] %v146
    %155 = vst [vmem:[#allocation2 + $0x18] sm:$0xff] %v149
    // Predicated region
    $region14: #{lora_mha_forward.5} parent=1 // pred_check
      _
    $region15: #{lora_mha_forward.5} parent=1 // pred_check_branch
      %157 = sbr.rel (0) target = $region17
    $region16: #{lora_mha_forward.5} parent=1 // pred_region
      %s159 = ssub.s32 512, 512
      %160 = vsyncadd [#allocation3], %s159
      %s161 = sshll.u32 [#allocation2], 4
      %s162 = int_to_ptr.vmem [resolvable:$true] %s161
      %167 = dma.vmem_to_hbm [thread:$0]  %s162, 512, %s3, [#allocation3], 128, 128, 8
    $region17: #{lora_mha_forward.5} parent=1 // pred_fallthru
      _
    // Predicated region
    $region18: #{lora_mha_forward.5} parent=1 // pred_check
      _
    $region19: #{lora_mha_forward.5} parent=1 // pred_check_branch
      %169 = sbr.rel (0) target = $region21
    $region20: #{lora_mha_forward.5} parent=1 // pred_region
      %170 = dma.done [#allocation3], 512
    $region21: #{lora_mha_forward.5} parent=1 // pred_fallthru
      _
    %171 = vsyncpa [#allocation3], 1

</llo_original>
